<compile_context>
chip_gen: v6e
topology: v6e:2x2x1
jax: 0.10.0
libtpu: 0.0.40
codegen_flags: <defaults>
</compile_context>

<pallas_src>
import functools
import math

import jax
import jax.numpy as jnp
from jax.experimental import pallas as pl
from jax.experimental.pallas import tpu as pltpu


def _round_up(x, m):
    return ((x + m - 1) // m) * m


def _supcon_kernel(pn_row_ref, pn_col_ref, y_row_ref, y_col_ref, loss_ref,
                   s1_ref, s2_ref, s3_ref, *,
                   inv_tau, n_valid, n_pad, tk, col_resident, bf16_exp):
    i = pl.program_id(0)              # row-tile index   ("parallel")
    j = pl.program_id(1)              # col-tile index   (reduction, "arbitrary")
    tm = pn_row_ref.shape[0]

    @pl.when(j == 0)
    def _init():
        s1_ref[...] = jnp.zeros_like(s1_ref)
        s2_ref[...] = jnp.zeros_like(s2_ref)
        s3_ref[...] = jnp.zeros_like(s3_ref)

    if col_resident:
        # Whole column matrix is VMEM-resident (constant index_map); slice the
        # current lane-aligned window out of it.
        off = pl.multiple_of(j * tk, 128)
        pn_col = pn_col_ref[:, pl.ds(off, tk)]            # (E, tk)
        y_col = y_col_ref[:, pl.ds(off, tk)]              # (1, tk)
    else:
        pn_col = pn_col_ref[...]                          # (E, tk)
        y_col = y_col_ref[...]                            # (1, tk)

    # (tm, tk) scaled-similarity tile on the MXU.  1/tau is already folded into
    # both operands (each row has norm sqrt(1/tau)), so sim = cos/tau directly.
    sim = jnp.dot(pn_row_ref[...], pn_col,
                  preferred_element_type=jnp.float32)     # (tm, tk) f32

    # Stable exp: cos <= 1  =>  sim <= 1/tau (up to rounding), so the shift by
    # 1/tau keeps the argument <= ~0.  Padded columns give sim == 0 exactly.
    shifted = sim - inv_tau
    if bf16_exp:
        # Optional EUP-bound lever on v6e/v7x (bf16 EUP); not used on v5e.
        e = jnp.exp(shifted.astype(jnp.bfloat16)).astype(jnp.float32)
    else:
        e = jnp.exp(shifted)                              # (tm, tk)

    # Positive mask.  Padded columns carry a sentinel label that never matches.
    posf = (y_row_ref[...] == y_col).astype(jnp.float32)  # (tm, tk)

    def lane_fold(x):
        # (tm, tk) -> (tm, 128): pure VPU adds of aligned 128-lane chunks
        # (no per-step cross-lane XLU reduction).
        acc = x[:, 0:128]
        for c in range(1, tk // 128):
            acc = acc + x[:, c * 128:(c + 1) * 128]
        return acc

    def accumulate(e_t, ps_t, p_t):
        s1_ref[...] += lane_fold(e_t)
        s2_ref[...] += lane_fold(ps_t)
        s3_ref[...] += lane_fold(p_t)

    row_start = i * tm
    col_start = j * tk
    diag_overlap = jnp.logical_and(row_start < col_start + tk,
                                   col_start < row_start + tm)

    @pl.when(diag_overlap)
    def _with_diag_mask():
        # Only the few tiles crossing the diagonal pay for the iota/compare.
        # Masking BEFORE accumulation avoids the `S1 - 1` cancellation and does
        # not rely on sim_ii == 1/tau being exact (it is not in bf16).
        rid = jax.lax.broadcasted_iota(jnp.int32, sim.shape, 0) + row_start
        cid = jax.lax.broadcasted_iota(jnp.int32, sim.shape, 1) + col_start
        nd = (rid != cid).astype(jnp.float32)
        pnd = posf * nd
        accumulate(e * nd, pnd * sim, pnd)

    @pl.when(jnp.logical_not(diag_overlap))
    def _off_diag():
        accumulate(e, posf * sim, posf)

    @pl.when(j == pl.num_programs(1) - 1)
    def _finalize():
        # Remove the analytic contribution of zero-embedding padded columns:
        # each contributed exp(0 - 1/tau) to S1 (and nothing to S2/S3).
        pad_cols = jnp.float32(n_pad - n_valid)
        if bf16_exp:
            pad_e = jnp.exp(jnp.float32(-inv_tau).astype(jnp.bfloat16)
                            ).astype(jnp.float32)
        else:
            pad_e = jnp.exp(jnp.float32(-inv_tau))
        s1 = jnp.sum(s1_ref[...], axis=1, keepdims=True) - pad_cols * pad_e
        s2 = jnp.sum(s2_ref[...], axis=1, keepdims=True)
        s3 = jnp.sum(s3_ref[...], axis=1, keepdims=True)
        log_denom = inv_tau + jnp.log(s1)   # = log sum_{k != i} exp(sim_ik)
        mean_log_prob_pos = (s2 - s3 * log_denom) / s3
        # Zero padded rows; real rows with no positives stay non-finite,
        # matching the PyTorch reference's degenerate behaviour.
        row_ids = jax.lax.broadcasted_iota(jnp.int32, (tm, 1), 0) + row_start
        loss_ref[...] = jnp.where(row_ids < n_valid, -mean_log_prob_pos, 0.0)


def supervised_contrastive_loss(z_i, z_j, y, tau, *,
                                row_block=256, col_block=512,
                                matmul_dtype=jnp.bfloat16,
                                bf16_exp=False,
                                resident_columns=None,
                                vmem_limit_bytes=None):
    """Pallas TPU implementation of SupervisedContrastiveLoss.forward.

    matmul_dtype=jnp.bfloat16 (default) gives MXU-peak operands and halves DMA
    traffic; accumulation stays f32.  Use jnp.float32 for bit-tight validation.
    resident_columns=None picks automatically from a conservative VMEM budget
    that is safe on v5e/v6e/v7x default scoped limits.
    """
    assert row_block % 128 == 0 and col_block % 128 == 0
    B, E = z_i.shape
    assert z_j.shape == (B, E) and y.shape == (B,)
    N = 2 * B
    inv_tau = 1.0 / float(tau)

    # Tiny XLA prologue (fused): concat + L2-normalize ONCE with rsqrt, and fold
    # sqrt(1/tau) into the same multiply so the kernel never scales sim.
    # Matches torch.nn.CosineSimilarity(eps=1e-8): norm clamped at 1e-8.
    p = jnp.concatenate([z_i, z_j], axis=0).astype(jnp.float32)        # (N, E)
    inv_norm = jax.lax.rsqrt(
        jnp.maximum(jnp.sum(p * p, axis=-1, keepdims=True), jnp.float32(1e-16)))
    pn = (p * (inv_norm * math.sqrt(inv_tau))).astype(matmul_dtype)    # (N, E)

    y2 = jnp.concatenate([y, y], axis=0).astype(jnp.int32)             # (N,)

    # Tiling: pad N to a multiple of 128; pick tile sizes that divide n_pad.
    n_pad = _round_up(N, 128)
    tm = 128 * math.gcd(n_pad // 128, row_block // 128)
    tk = 128 * math.gcd(n_pad // 128, col_block // 128)
    # Keep >= 2 row tiles when possible so the "parallel" row axis can split
    # across v7x's two TensorCores (no effect on single-TC v5e/v6e correctness).
    if n_pad // tm < 2 and n_pad >= 256:
        tm = n_pad // 2
    grid = (n_pad // tm, n_pad // tk)
    pad = n_pad - N

    pn_rows = jnp.pad(pn, ((0, pad), (0, 0)))                          # (n_pad, E)
    pn_cols = pn_rows.T                                                # (E, n_pad), one-time transpose

    # Sentinel label for padded columns: can never equal a real label, so the
    # kernel needs no per-tile column-validity masking for S2/S3.
    sentinel = jnp.min(y2) - 1
    y_pad = jnp.concatenate(
        [y2, jnp.broadcast_to(sentinel, (pad,)).astype(jnp.int32)])
    y_row = y_pad.reshape(n_pad, 1)
    y_col = y_pad.reshape(1, n_pad)

    # Resident-column decision: single-copy bytes <= 4 MiB (<= 8 MiB with
    # double buffering) fits comfortably inside every chip's default scoped
    # VMEM (incl. v7x's 64 MiB/TC).  Larger configs stream columns per tile.
    col_bytes = n_pad * E * jnp.dtype(matmul_dtype).itemsize
    if resident_columns is None:
        resident_columns = col_bytes <= 4 * 1024 * 1024

    if resident_columns:
        col_spec = pl.BlockSpec((E, n_pad), lambda i, j: (0, 0))
        ycol_spec = pl.BlockSpec((1, n_pad), lambda i, j: (0, 0))
    else:
        col_spec = pl.BlockSpec((E, tk), lambda i, j: (0, j))
        ycol_spec = pl.BlockSpec((1, tk), lambda i, j: (0, j))

    cp_kwargs = dict(dimension_semantics=("parallel", "arbitrary"))
    if vmem_limit_bytes is not None:
        cp_kwargs["vmem_limit_bytes"] = int(vmem_limit_bytes)

    per_row = pl.pallas_call(
        functools.partial(_supcon_kernel, inv_tau=inv_tau, n_valid=N,
                          n_pad=n_pad, tk=tk, col_resident=resident_columns,
                          bf16_exp=bf16_exp),
        out_shape=jax.ShapeDtypeStruct((n_pad, 1), jnp.float32),
        grid_spec=pltpu.PrefetchScalarGridSpec(
            num_scalar_prefetch=0,
            grid=grid,
            in_specs=[
                pl.BlockSpec((tm, E), lambda i, j: (i, 0)),   # row embeddings
                col_spec,                                     # col embeddings (E, .)
                pl.BlockSpec((tm, 1), lambda i, j: (i, 0)),   # row labels
                ycol_spec,                                    # col labels (lane-dense)
            ],
            out_specs=pl.BlockSpec((tm, 1), lambda i, j: (i, 0)),
            scratch_shapes=[pltpu.VMEM((tm, 128), jnp.float32)] * 3,
        ),
        compiler_params=pltpu.CompilerParams(**cp_kwargs),
    )(pn_rows, pn_cols, y_row, y_col)

    # TODO(synk): per-row output stays (tm, 1); a lane-dense / per-tile partial
    # sum output is a minor further win (finalize runs once per row tile).
    return jnp.sum(per_row)


def _reference(z_i, z_j, y, tau):
    """Plain-JAX reference mirroring the PyTorch module."""
    p = jnp.concatenate([z_i, z_j], axis=0).astype(jnp.float32)
    norm = jnp.maximum(jnp.linalg.norm(p, axis=-1, keepdims=True), 1e-8)
    pn = p / norm
    sim = (pn @ pn.T) / tau
    y2 = jnp.concatenate([y, y], axis=0).reshape(-1, 1)
    mask = (y2 == y2.T).astype(jnp.float32)
    n = mask.shape[0]
    eye = jnp.eye(n, dtype=jnp.float32)
    mask = mask * (1.0 - eye)
    logit_mask = 1.0 - eye
    exp_logits = jnp.exp(sim) * logit_mask
    log_prob = sim - jnp.log(exp_logits.sum(axis=1, keepdims=True))
    mean_log_prob_pos = (mask * log_prob).sum(axis=1) / mask.sum(axis=1)
    return -mean_log_prob_pos.sum()


if __name__ == "__main__":
    key = jax.random.PRNGKey(0)
    tau = 0.5

    # Case 1: small shape from the module spec (single tile after padding).
    B, E = 8, 32
    k1, k2 = jax.random.split(key)
    z_i = jax.random.normal(k1, (B, E), dtype=jnp.float32)
    z_j = jax.random.normal(k2, (B, E), dtype=jnp.float32)
    y = jnp.array([0, 0, 1, 1, 2, 2, 3, 3], dtype=jnp.int32)
    ref = _reference(z_i, z_j, y, tau)

    loss_f32 = supervised_contrastive_loss(z_i, z_j, y, tau,
                                           matmul_dtype=jnp.float32)
    jax.block_until_ready(loss_f32)
    assert jnp.allclose(loss_f32, ref, rtol=1e-4, atol=1e-3), (loss_f32, ref)

    loss_bf16 = supervised_contrastive_loss(z_i, z_j, y, tau)  # default bf16 MXU
    jax.block_until_ready(loss_bf16)
    assert jnp.allclose(loss_bf16, ref, rtol=2e-2, atol=2e-2), (loss_bf16, ref)

    # Case 2: multi-tile accumulation, diagonal-band masking per row tile,
    # padding correction (N=160 padded to 256), streamed AND resident columns.
    B2, E2 = 80, 64
    k3, k4 = jax.random.split(k2)
    z_i2 = jax.random.normal(k3, (B2, E2), dtype=jnp.float32)
    z_j2 = jax.random.normal(k4, (B2, E2), dtype=jnp.float32)
    y2 = (jnp.arange(B2) % 10).astype(jnp.int32)   # every label has positives
    ref2 = _reference(z_i2, z_j2, y2, tau)

    loss2_f32 = supervised_contrastive_loss(
        z_i2, z_j2, y2, tau, row_block=128, col_block=128,
        matmul_dtype=jnp.float32, resident_columns=False)      # streamed path
    jax.block_until_ready(loss2_f32)
    assert jnp.allclose(loss2_f32, ref2, rtol=1e-4, atol=5e-2), (loss2_f32, ref2)

    loss2_bf16 = supervised_contrastive_loss(z_i2, z_j2, y2, tau)  # resident path
    jax.block_until_ready(loss2_bf16)
    assert jnp.allclose(loss2_bf16, ref2, rtol=2e-2, atol=2e-2), (loss2_bf16, ref2)

    print("KERNEL_OK")
</pallas_src>

<mosaic_0001>
module attributes {stable_mosaic.version = 11 : i64} {
  func.func @_supcon_kernel(%arg0: i32, %arg1: i32, %arg2: memref<128x32xf32, #tpu.memory_space<vmem>>, %arg3: memref<32x128xf32, #tpu.memory_space<vmem>>, %arg4: memref<128x1xi32, #tpu.memory_space<vmem>>, %arg5: memref<1x128xi32, #tpu.memory_space<vmem>>, %arg6: memref<128x1xf32, #tpu.memory_space<vmem>>, %arg7: memref<128x128xf32, #tpu.memory_space<vmem>>, %arg8: memref<128x128xf32, #tpu.memory_space<vmem>>, %arg9: memref<128x128xf32, #tpu.memory_space<vmem>>) attributes {dimension_semantics = [#tpu.dimension_semantics<parallel>, #tpu.dimension_semantics<arbitrary>], iteration_bounds = array<i64: 1, 1>, scalar_prefetch = 0 : i64, scratch_operands = 3 : i64, tpu.core_type = #tpu.core_type<tc>, window_params = [{transform_indices = @transform_0, window_bounds = array<i64: 128, 32>}, {pipeline_mode = #tpu.pipeline_mode<synchronous>, transform_indices = @transform_1, window_bounds = array<i64: 32, 128>}, {transform_indices = @transform_2, window_bounds = array<i64: 128, 1>}, {pipeline_mode = #tpu.pipeline_mode<synchronous>, transform_indices = @transform_3, window_bounds = array<i64: 1, 128>}, {transform_indices = @transform_4, window_bounds = array<i64: 128, 1>}]} {
    %c0_i32 = arith.constant 0 : i32
    %0 = arith.cmpi eq, %arg1, %c0_i32 : i32
    %1 = arith.extui %0 : i1 to i32
    %c0_i32_0 = arith.constant 0 : i32
    %2 = arith.cmpi ne, %1, %c0_i32_0 : i32
    scf.if %2 {
      %cst_15 = arith.constant 0.000000e+00 : f32
      %35 = vector.broadcast %cst_15 : f32 to vector<128x128xf32>
      %c0_16 = arith.constant 0 : index
      %c0_17 = arith.constant 0 : index
      %36 = vector.load %arg7[%c0_16, %c0_17] : memref<128x128xf32, #tpu.memory_space<vmem>>, vector<128x128xf32>
      tpu.vector_store %arg7[%c0_16, %c0_17], %35 {strides = array<i32>} : memref<128x128xf32, #tpu.memory_space<vmem>>, vector<128x128xf32>,
      %cst_18 = arith.constant 0.000000e+00 : f32
      %37 = vector.broadcast %cst_18 : f32 to vector<128x128xf32>
      %c0_19 = arith.constant 0 : index
      %c0_20 = arith.constant 0 : index
      %38 = vector.load %arg8[%c0_19, %c0_20] : memref<128x128xf32, #tpu.memory_space<vmem>>, vector<128x128xf32>
      tpu.vector_store %arg8[%c0_19, %c0_20], %37 {strides = array<i32>} : memref<128x128xf32, #tpu.memory_space<vmem>>, vector<128x128xf32>,
      %cst_21 = arith.constant 0.000000e+00 : f32
      %39 = vector.broadcast %cst_21 : f32 to vector<128x128xf32>
      %c0_22 = arith.constant 0 : index
      %c0_23 = arith.constant 0 : index
      %40 = vector.load %arg9[%c0_22, %c0_23] : memref<128x128xf32, #tpu.memory_space<vmem>>, vector<128x128xf32>
      tpu.vector_store %arg9[%c0_22, %c0_23], %39 {strides = array<i32>} : memref<128x128xf32, #tpu.memory_space<vmem>>, vector<128x128xf32>,
    } else {
    }
    %c128_i32 = arith.constant 128 : i32
    %3 = arith.muli %arg1, %c128_i32 : i32
    %4 = tpu.assume_multiple %3, 128 : i32
    %c0 = arith.constant 0 : index
    %5 = arith.index_cast %4 : i32 to index
    %6 = vector.load %arg3[%c0, %5] : memref<32x128xf32, #tpu.memory_space<vmem>>, vector<32x128xf32>
    %c0_1 = arith.constant 0 : index
    %7 = arith.index_cast %4 : i32 to index
    %8 = vector.load %arg5[%c0_1, %7] : memref<1x128xi32, #tpu.memory_space<vmem>>, vector<1x128xi32>
    %c0_2 = arith.constant 0 : index
    %c0_3 = arith.constant 0 : index
    %9 = vector.load %arg2[%c0_2, %c0_3] : memref<128x32xf32, #tpu.memory_space<vmem>>, vector<128x32xf32>
    %cst = arith.constant dense<0.000000e+00> : vector<128x128xf32>
    %10 = tpu.matmul %9, %6, %cst {dimension_numbers = #tpu.dot_dimension_numbers<[1], [0], [0], [1], [0, 0, 1, 1], [], []>} : vector<128x32xf32>, vector<32x128xf32>, vector<128x128xf32> -> vector<128x128xf32>
    %cst_4 = arith.constant 2.000000e+00 : f32
    %11 = vector.broadcast %cst_4 : f32 to vector<128x128xf32>
    %12 = arith.subf %10, %11 : vector<128x128xf32>
    %13 = math.exp %12 : vector<128x128xf32>
    %c0_5 = arith.constant 0 : index
    %c0_6 = arith.constant 0 : index
    %14 = vector.load %arg4[%c0_5, %c0_6] : memref<128x1xi32, #tpu.memory_space<vmem>>, vector<128x1xi32>
    %15 = vector.broadcast %14 : vector<128x1xi32> to vector<128x128xi32>
    %16 = vector.broadcast %8 : vector<1x128xi32> to vector<128x128xi32>
    %17 = arith.cmpi eq, %15, %16 : vector<128x128xi32>
    %18 = arith.extui %17 : vector<128x128xi1> to vector<128x128xi32>
    %19 = arith.sitofp %18 : vector<128x128xi32> to vector<128x128xf32>
    %c128_i32_7 = arith.constant 128 : i32
    %20 = arith.muli %arg0, %c128_i32_7 : i32
    %c128_i32_8 = arith.constant 128 : i32
    %21 = arith.muli %arg1, %c128_i32_8 : i32
    %c128_i32_9 = arith.constant 128 : i32
    %22 = arith.addi %21, %c128_i32_9 : i32
    %23 = arith.cmpi slt, %20, %22 : i32
    %c128_i32_10 = arith.constant 128 : i32
    %24 = arith.addi %20, %c128_i32_10 : i32
    %25 = arith.cmpi slt, %21, %24 : i32
    %26 = arith.andi %23, %25 : i1
    %27 = arith.extui %26 : i1 to i32
    %c0_i32_11 = arith.constant 0 : i32
    %28 = arith.cmpi ne, %27, %c0_i32_11 : i32
    scf.if %28 {
      %35 = tpu.iota {dimensions = array<i32: 0>} : vector<128x128xi32>
      %36 = vector.broadcast %20 : i32 to vector<128x128xi32>
      %37 = arith.addi %35, %36 : vector<128x128xi32>
      %38 = tpu.iota {dimensions = array<i32: 1>} : vector<128x128xi32>
      %39 = vector.broadcast %21 : i32 to vector<128x128xi32>
      %40 = arith.addi %38, %39 : vector<128x128xi32>
      %41 = arith.cmpi ne, %37, %40 : vector<128x128xi32>
      %42 = arith.extui %41 : vector<128x128xi1> to vector<128x128xi32>
      %43 = arith.sitofp %42 : vector<128x128xi32> to vector<128x128xf32>
      %44 = arith.mulf %19, %43 : vector<128x128xf32>
      %45 = arith.mulf %13, %43 : vector<128x128xf32>
      %46 = arith.mulf %44, %10 : vector<128x128xf32>
      %c0_15 = arith.constant 0 : index
      %c0_16 = arith.constant 0 : index
      %47 = vector.load %arg7[%c0_15, %c0_16] : memref<128x128xf32, #tpu.memory_space<vmem>>, vector<128x128xf32>
      %48 = arith.addf %47, %45 : vector<128x128xf32>
      %c0_17 = arith.constant 0 : index
      %c0_18 = arith.constant 0 : index
      %49 = vector.load %arg7[%c0_17, %c0_18] : memref<128x128xf32, #tpu.memory_space<vmem>>, vector<128x128xf32>
      tpu.vector_store %arg7[%c0_17, %c0_18], %48 {strides = array<i32>} : memref<128x128xf32, #tpu.memory_space<vmem>>, vector<128x128xf32>,
      %c0_19 = arith.constant 0 : index
      %c0_20 = arith.constant 0 : index
      %50 = vector.load %arg8[%c0_19, %c0_20] : memref<128x128xf32, #tpu.memory_space<vmem>>, vector<128x128xf32>
      %51 = arith.addf %50, %46 : vector<128x128xf32>
      %c0_21 = arith.constant 0 : index
      %c0_22 = arith.constant 0 : index
      %52 = vector.load %arg8[%c0_21, %c0_22] : memref<128x128xf32, #tpu.memory_space<vmem>>, vector<128x128xf32>
      tpu.vector_store %arg8[%c0_21, %c0_22], %51 {strides = array<i32>} : memref<128x128xf32, #tpu.memory_space<vmem>>, vector<128x128xf32>,
      %c0_23 = arith.constant 0 : index
      %c0_24 = arith.constant 0 : index
      %53 = vector.load %arg9[%c0_23, %c0_24] : memref<128x128xf32, #tpu.memory_space<vmem>>, vector<128x128xf32>
      %54 = arith.addf %53, %44 : vector<128x128xf32>
      %c0_25 = arith.constant 0 : index
      %c0_26 = arith.constant 0 : index
      %55 = vector.load %arg9[%c0_25, %c0_26] : memref<128x128xf32, #tpu.memory_space<vmem>>, vector<128x128xf32>
      tpu.vector_store %arg9[%c0_25, %c0_26], %54 {strides = array<i32>} : memref<128x128xf32, #tpu.memory_space<vmem>>, vector<128x128xf32>,
    } else {
    }
    %true = arith.constant true
    %29 = arith.xori %26, %true : i1
    %30 = arith.extui %29 : i1 to i32
    %c0_i32_12 = arith.constant 0 : i32
    %31 = arith.cmpi ne, %30, %c0_i32_12 : i32
    scf.if %31 {
      %35 = arith.mulf %19, %10 : vector<128x128xf32>
      %c0_15 = arith.constant 0 : index
      %c0_16 = arith.constant 0 : index
      %36 = vector.load %arg7[%c0_15, %c0_16] : memref<128x128xf32, #tpu.memory_space<vmem>>, vector<128x128xf32>
      %37 = arith.addf %36, %13 : vector<128x128xf32>
      %c0_17 = arith.constant 0 : index
      %c0_18 = arith.constant 0 : index
      %38 = vector.load %arg7[%c0_17, %c0_18] : memref<128x128xf32, #tpu.memory_space<vmem>>, vector<128x128xf32>
      tpu.vector_store %arg7[%c0_17, %c0_18], %37 {strides = array<i32>} : memref<128x128xf32, #tpu.memory_space<vmem>>, vector<128x128xf32>,
      %c0_19 = arith.constant 0 : index
      %c0_20 = arith.constant 0 : index
      %39 = vector.load %arg8[%c0_19, %c0_20] : memref<128x128xf32, #tpu.memory_space<vmem>>, vector<128x128xf32>
      %40 = arith.addf %39, %35 : vector<128x128xf32>
      %c0_21 = arith.constant 0 : index
      %c0_22 = arith.constant 0 : index
      %41 = vector.load %arg8[%c0_21, %c0_22] : memref<128x128xf32, #tpu.memory_space<vmem>>, vector<128x128xf32>
      tpu.vector_store %arg8[%c0_21, %c0_22], %40 {strides = array<i32>} : memref<128x128xf32, #tpu.memory_space<vmem>>, vector<128x128xf32>,
      %c0_23 = arith.constant 0 : index
      %c0_24 = arith.constant 0 : index
      %42 = vector.load %arg9[%c0_23, %c0_24] : memref<128x128xf32, #tpu.memory_space<vmem>>, vector<128x128xf32>
      %43 = arith.addf %42, %19 : vector<128x128xf32>
      %c0_25 = arith.constant 0 : index
      %c0_26 = arith.constant 0 : index
      %44 = vector.load %arg9[%c0_25, %c0_26] : memref<128x128xf32, #tpu.memory_space<vmem>>, vector<128x128xf32>
      tpu.vector_store %arg9[%c0_25, %c0_26], %43 {strides = array<i32>} : memref<128x128xf32, #tpu.memory_space<vmem>>, vector<128x128xf32>,
    } else {
    }
    %c0_i32_13 = arith.constant 0 : i32
    %32 = arith.cmpi eq, %arg1, %c0_i32_13 : i32
    %33 = arith.extui %32 : i1 to i32
    %c0_i32_14 = arith.constant 0 : i32
    %34 = arith.cmpi ne, %33, %c0_i32_14 : i32
    scf.if %34 {
      %cst_15 = arith.constant -2.000000e+00 : f32
      %35 = math.exp %cst_15 : f32
      %c0_16 = arith.constant 0 : index
      %c0_17 = arith.constant 0 : index
      %36 = vector.load %arg7[%c0_16, %c0_17] : memref<128x128xf32, #tpu.memory_space<vmem>>, vector<128x128xf32>
      %cst_18 = arith.constant dense<0.000000e+00> : vector<128xf32>
      %37 = vector.multi_reduction <add>, %36, %cst_18 [1] : vector<128x128xf32> to vector<128xf32>
      %38 = vector.shape_cast %37 : vector<128xf32> to vector<128x1xf32>
      %cst_19 = arith.constant 1.120000e+02 : f32
      %39 = arith.mulf %cst_19, %35 : f32
      %40 = vector.broadcast %39 : f32 to vector<128x1xf32>
      %41 = arith.subf %38, %40 : vector<128x1xf32>
      %c0_20 = arith.constant 0 : index
      %c0_21 = arith.constant 0 : index
      %42 = vector.load %arg8[%c0_20, %c0_21] : memref<128x128xf32, #tpu.memory_space<vmem>>, vector<128x128xf32>
      %cst_22 = arith.constant dense<0.000000e+00> : vector<128xf32>
      %43 = vector.multi_reduction <add>, %42, %cst_22 [1] : vector<128x128xf32> to vector<128xf32>
      %44 = vector.shape_cast %43 : vector<128xf32> to vector<128x1xf32>
      %c0_23 = arith.constant 0 : index
      %c0_24 = arith.constant 0 : index
      %45 = vector.load %arg9[%c0_23, %c0_24] : memref<128x128xf32, #tpu.memory_space<vmem>>, vector<128x128xf32>
      %cst_25 = arith.constant dense<0.000000e+00> : vector<128xf32>
      %46 = vector.multi_reduction <add>, %45, %cst_25 [1] : vector<128x128xf32> to vector<128xf32>
      %47 = vector.shape_cast %46 : vector<128xf32> to vector<128x1xf32>
      %48 = math.log %41 : vector<128x1xf32>
      %cst_26 = arith.constant 2.000000e+00 : f32
      %49 = vector.broadcast %cst_26 : f32 to vector<128x1xf32>
      %50 = arith.addf %49, %48 : vector<128x1xf32>
      %51 = arith.mulf %47, %50 : vector<128x1xf32>
      %52 = arith.subf %44, %51 : vector<128x1xf32>
      %53 = arith.divf %52, %47 : vector<128x1xf32>
      %54 = tpu.iota {dimensions = array<i32: 0>} : vector<128x1xi32>
      %55 = vector.broadcast %20 : i32 to vector<128x1xi32>
      %56 = arith.addi %54, %55 : vector<128x1xi32>
      %c16_i32 = arith.constant 16 : i32
      %57 = vector.broadcast %c16_i32 : i32 to vector<128x1xi32>
      %58 = arith.cmpi slt, %56, %57 : vector<128x1xi32>
      %cst_27 = arith.constant 0.000000e+00 : f32
      %59 = vector.broadcast %cst_27 : f32 to vector<128x1xf32>
      %60 = arith.subf %59, %53 : vector<128x1xf32>
      %cst_28 = arith.constant 0.000000e+00 : f32
      %61 = vector.broadcast %cst_28 : f32 to vector<128x1xf32>
      %62 = arith.select %58, %60, %61 : vector<128x1xi1>, vector<128x1xf32>
      %c0_29 = arith.constant 0 : index
      %c0_30 = arith.constant 0 : index
      %63 = vector.load %arg6[%c0_29, %c0_30] : memref<128x1xf32, #tpu.memory_space<vmem>>, vector<128x1xf32>
      tpu.vector_store %arg6[%c0_29, %c0_30], %62 {strides = array<i32>} : memref<128x1xf32, #tpu.memory_space<vmem>>, vector<128x1xf32>,
    } else {
    }
    return
  }
  func.func @transform_0(%arg0: i32, %arg1: i32) -> (i32, i32) {
    %c0_i32 = arith.constant 0 : i32
    %c0_i32_0 = arith.constant 0 : i32
    return %arg0, %c0_i32 : i32, i32
  }
  func.func @transform_1(%arg0: i32, %arg1: i32) -> (i32, i32) {
    %c0_i32 = arith.constant 0 : i32
    %c0_i32_0 = arith.constant 0 : i32
    %c0_i32_1 = arith.constant 0 : i32
    return %c0_i32, %c0_i32_0 : i32, i32
  }
  func.func @transform_2(%arg0: i32, %arg1: i32) -> (i32, i32) {
    %c0_i32 = arith.constant 0 : i32
    %c0_i32_0 = arith.constant 0 : i32
    return %arg0, %c0_i32 : i32, i32
  }
  func.func @transform_3(%arg0: i32, %arg1: i32) -> (i32, i32) {
    %c0_i32 = arith.constant 0 : i32
    %c0_i32_0 = arith.constant 0 : i32
    %c0_i32_1 = arith.constant 0 : i32
    return %c0_i32, %c0_i32_0 : i32, i32
  }
  func.func @transform_4(%arg0: i32, %arg1: i32) -> (i32, i32) {
    %c0_i32 = arith.constant 0 : i32
    %c0_i32_0 = arith.constant 0 : i32
    return %arg0, %c0_i32 : i32, i32
  }
}

</mosaic_0001>

<llo_original>
// kernel: tpu_custom_call.1
$region0: #{tpu_custom_call.1}
  #allocation0 [shape = 'u32[]', space=smem, size = 0x4, offset = 0x4, fixed_abs, tag = 'smem constant byte address 0x4 - core index']
  #allocation1 [shape = 'u32[144,128]{1,0:T(1,128)}', space=vmem, size = 0x12000, scoped, tag = 'internal scratch']
  #allocation2 [shape = 'f32[128,128]{1,0:T(8,128)}', space=vmem, size = 0x10000, scoped, tag = 'scratch operand']
  #allocation3 [shape = 'f32[128,128]{1,0:T(8,128)}', space=vmem, size = 0x10000, scoped, tag = 'scratch operand']
  #allocation4 [shape = 'f32[128,128]{1,0:T(8,128)}', space=vmem, size = 0x10000, scoped, tag = 'scratch operand']
  %s0 = inlined_call_operand.vmem [shape: f32[128,32], index: 0, kind: input, shape index: {}]
  %s1 = inlined_call_operand.vmem [shape: f32[32,128], index: 1, kind: input, shape index: {}]
  %s2 = inlined_call_operand.vmem [shape: s32[128,1], index: 2, kind: input, shape index: {}]
  %s3 = inlined_call_operand.vmem [shape: s32[1,128], index: 3, kind: input, shape index: {}]
  %s4 = inlined_call_operand.vmem [shape: f32[128,1], index: 4, kind: output, shape index: {}]
  %s5 = sld [smem:[#allocation0]]
  $region42: #{tpu_custom_call.1} parent=0
    _
  %s7 = ssub.s32 1, %s5
  %s8 = scalar_select 0, %s7, %s5
  // Predicated region
  $region2: #{tpu_custom_call.1} parent=0 // pred_check
    _
  $region3: #{tpu_custom_call.1} parent=0 // pred_check_branch
    %10 = sbr.rel (0) target = $region5
  $region4: #{tpu_custom_call.1} parent=0 // pred_region
    _
  $region5: #{tpu_custom_call.1} parent=0 // pred_fallthru
    _
  // Predicated region
  $region6: #{tpu_custom_call.1} parent=0 // pred_check
    _
  $region7: #{tpu_custom_call.1} parent=0 // pred_check_branch
    %12 = sbr.rel (0) target = $region9
  $region8: #{tpu_custom_call.1} parent=0 // pred_region
    _
  $region9: #{tpu_custom_call.1} parent=0 // pred_fallthru
    _
  // Predicated region
  $region10: #{tpu_custom_call.1} parent=0 // pred_check
    _
  $region11: #{tpu_custom_call.1} parent=0 // pred_check_branch
    %14 = sbr.rel (0) target = $region13
  $region12: #{tpu_custom_call.1} parent=0 // pred_region
    _
  $region13: #{tpu_custom_call.1} parent=0 // pred_fallthru
    _
  // Predicated region
  $region14: #{tpu_custom_call.1} parent=0 // pred_check
    _
  $region15: #{tpu_custom_call.1} parent=0 // pred_check_branch
    %16 = sbr.rel (0) target = $region17
  $region16: #{tpu_custom_call.1} parent=0 // pred_region
    _
  $region17: #{tpu_custom_call.1} parent=0 // pred_fallthru
    _
  %p17 = scmp.eq.s32.totalorder 0, 0
  // Predicated region
  $region18: #{tpu_custom_call.1} parent=0 // pred_check
    %p18 = pneg %p17
  $region19: #{tpu_custom_call.1} parent=0 // pred_check_branch
    %20 = sbr.rel (%p18) target = $region21
  $region20: #{tpu_custom_call.1} parent=0 // pred_region
    %21 = vst [vmem:[#allocation2] sm:$0xff] 0.0
    %22 = vst [vmem:[#allocation2 + $0x8] sm:$0xff] 0.0
    %23 = vst [vmem:[#allocation2 + $0x10] sm:$0xff] 0.0
    %24 = vst [vmem:[#allocation2 + $0x18] sm:$0xff] 0.0
    %25 = vst [vmem:[#allocation2 + $0x20] sm:$0xff] 0.0
    %26 = vst [vmem:[#allocation2 + $0x28] sm:$0xff] 0.0
    %27 = vst [vmem:[#allocation2 + $0x30] sm:$0xff] 0.0
    %28 = vst [vmem:[#allocation2 + $0x38] sm:$0xff] 0.0
    %29 = vst [vmem:[#allocation2 + $0x40] sm:$0xff] 0.0
    %30 = vst [vmem:[#allocation2 + $0x48] sm:$0xff] 0.0
    %31 = vst [vmem:[#allocation2 + $0x50] sm:$0xff] 0.0
    %32 = vst [vmem:[#allocation2 + $0x58] sm:$0xff] 0.0
    %33 = vst [vmem:[#allocation2 + $0x60] sm:$0xff] 0.0
    %34 = vst [vmem:[#allocation2 + $0x68] sm:$0xff] 0.0
    %35 = vst [vmem:[#allocation2 + $0x70] sm:$0xff] 0.0
    %36 = vst [vmem:[#allocation2 + $0x78] sm:$0xff] 0.0
    %37 = vst [vmem:[#allocation3] sm:$0xff] 0.0
    %38 = vst [vmem:[#allocation3 + $0x8] sm:$0xff] 0.0
    %39 = vst [vmem:[#allocation3 + $0x10] sm:$0xff] 0.0
    %40 = vst [vmem:[#allocation3 + $0x18] sm:$0xff] 0.0
    %41 = vst [vmem:[#allocation3 + $0x20] sm:$0xff] 0.0
    %42 = vst [vmem:[#allocation3 + $0x28] sm:$0xff] 0.0
    %43 = vst [vmem:[#allocation3 + $0x30] sm:$0xff] 0.0
    %44 = vst [vmem:[#allocation3 + $0x38] sm:$0xff] 0.0
    %45 = vst [vmem:[#allocation3 + $0x40] sm:$0xff] 0.0
    %46 = vst [vmem:[#allocation3 + $0x48] sm:$0xff] 0.0
    %47 = vst [vmem:[#allocation3 + $0x50] sm:$0xff] 0.0
    %48 = vst [vmem:[#allocation3 + $0x58] sm:$0xff] 0.0
    %49 = vst [vmem:[#allocation3 + $0x60] sm:$0xff] 0.0
    %50 = vst [vmem:[#allocation3 + $0x68] sm:$0xff] 0.0
    %51 = vst [vmem:[#allocation3 + $0x70] sm:$0xff] 0.0
    %52 = vst [vmem:[#allocation3 + $0x78] sm:$0xff] 0.0
    %53 = vst [vmem:[#allocation4] sm:$0xff] 0.0
    %54 = vst [vmem:[#allocation4 + $0x8] sm:$0xff] 0.0
    %55 = vst [vmem:[#allocation4 + $0x10] sm:$0xff] 0.0
    %56 = vst [vmem:[#allocation4 + $0x18] sm:$0xff] 0.0
    %57 = vst [vmem:[#allocation4 + $0x20] sm:$0xff] 0.0
    %58 = vst [vmem:[#allocation4 + $0x28] sm:$0xff] 0.0
    %59 = vst [vmem:[#allocation4 + $0x30] sm:$0xff] 0.0
    %60 = vst [vmem:[#allocation4 + $0x38] sm:$0xff] 0.0
    %61 = vst [vmem:[#allocation4 + $0x40] sm:$0xff] 0.0
    %62 = vst [vmem:[#allocation4 + $0x48] sm:$0xff] 0.0
    %63 = vst [vmem:[#allocation4 + $0x50] sm:$0xff] 0.0
    %64 = vst [vmem:[#allocation4 + $0x58] sm:$0xff] 0.0
    %65 = vst [vmem:[#allocation4 + $0x60] sm:$0xff] 0.0
    %66 = vst [vmem:[#allocation4 + $0x68] sm:$0xff] 0.0
    %67 = vst [vmem:[#allocation4 + $0x70] sm:$0xff] 0.0
    %68 = vst [vmem:[#allocation4 + $0x78] sm:$0xff] 0.0
  $region21: #{tpu_custom_call.1} parent=0 // pred_fallthru
    _
  %s69 = smul.u32 0, 128
  %s70 = sshra.s32 %s69, 7
  %s71 = sand.u32 %s69, 127
  %s72 = scalar_lea.vmem %s1, %s70
  %v73 = vld [vmem:[%s72] sm:$0xff]
  %v74 = vld [vmem:[%s72 + $0x8] sm:$0xff]
  %v75 = vld [vmem:[%s72 + $0x10] sm:$0xff]
  %v76 = vld [vmem:[%s72 + $0x18] sm:$0xff]
  %s77 = scalar_lea.vmem %s3, %s70
  %v78 = vld [vmem:[%s77] sm:$0x1]
  %v79 = vld [vmem:[%s0] sm:$0xff]
  %v80 = vld [vmem:[%s0 + $0x8] sm:$0xff]
  %v81 = vld [vmem:[%s0 + $0x10] sm:$0xff]
  %v82 = vld [vmem:[%s0 + $0x18] sm:$0xff]
  %v83 = vld [vmem:[%s0 + $0x20] sm:$0xff]
  %v84 = vld [vmem:[%s0 + $0x28] sm:$0xff]
  %v85 = vld [vmem:[%s0 + $0x30] sm:$0xff]
  %v86 = vld [vmem:[%s0 + $0x38] sm:$0xff]
  %v87 = vld [vmem:[%s0 + $0x40] sm:$0xff]
  %v88 = vld [vmem:[%s0 + $0x48] sm:$0xff]
  %v89 = vld [vmem:[%s0 + $0x50] sm:$0xff]
  %v90 = vld [vmem:[%s0 + $0x58] sm:$0xff]
  %v91 = vld [vmem:[%s0 + $0x60] sm:$0xff]
  %v92 = vld [vmem:[%s0 + $0x68] sm:$0xff]
  %v93 = vld [vmem:[%s0 + $0x70] sm:$0xff]
  %v94 = vld [vmem:[%s0 + $0x78] sm:$0xff]
  %vm95 = vcmask 261120
  %v97 = vsel %vm95, %v79, 0
  %v100 = vsel %vm95, %v80, 0
  %v103 = vsel %vm95, %v81, 0
  %v106 = vsel %vm95, %v82, 0
  %v109 = vsel %vm95, %v83, 0
  %v112 = vsel %vm95, %v84, 0
  %v115 = vsel %vm95, %v85, 0
  %v118 = vsel %vm95, %v86, 0
  %v121 = vsel %vm95, %v87, 0
  %v124 = vsel %vm95, %v88, 0
  %v127 = vsel %vm95, %v89, 0
  %v130 = vsel %vm95, %v90, 0
  %v133 = vsel %vm95, %v91, 0
  %v136 = vsel %vm95, %v92, 0
  %v139 = vsel %vm95, %v93, 0
  %v142 = vsel %vm95, %v94, 0
  %144 = vmatprep.subr.mxu0 0.0
  %145 = vmatpush1.msra.mxu0 0.0
  %146 = vmatprep.subr.mxu0 0.0
  %147 = vmatpush1.msra.mxu0 0.0
  %148 = vmatprep.subr.mxu0 0.0
  %149 = vmatpush1.msra.mxu0 0.0
  %150 = vmatprep.subr.mxu0 0.0
  %151 = vmatpush1.msra.mxu0 0.0
  %152 = vmatprep.subr.mxu0 0.0
  %153 = vmatpush1.msra.mxu0 0.0
  %154 = vmatprep.subr.mxu0 0.0
  %155 = vmatpush1.msra.mxu0 0.0
  %156 = vmatprep.subr.mxu0 0.0
  %157 = vmatpush1.msra.mxu0 0.0
  %158 = vmatprep.subr.mxu0 0.0
  %159 = vmatpush1.msra.mxu0 0.0
  %160 = vmatprep.subr.mxu0 0.0
  %161 = vmatpush1.msra.mxu0 0.0
  %162 = vmatprep.subr.mxu0 0.0
  %163 = vmatpush1.msra.mxu0 0.0
  %164 = vmatprep.subr.mxu0 0.0
  %165 = vmatpush1.msra.mxu0 0.0
  %166 = vmatprep.subr.mxu0 0.0
  %167 = vmatpush1.msra.mxu0 0.0
  %168 = vmatprep.subr.mxu0 0.0
  %169 = vmatpush1.msra.mxu0 %v76
  %170 = vmatprep.subr.mxu0 0.0
  %171 = vmatpush1.msra.mxu0 %v75
  %172 = vmatprep.subr.mxu0 0.0
  %173 = vmatpush1.msra.mxu0 %v74
  %174 = vmatprep.subr.mxu0 0.0
  %175 = vmatpush1.msra.mxu0 %v73
  %176 = vmatprep.subr.mxu0 0.0
  %177 = vmatpush2.msra.mxu0 0.0
  %178 = vmatprep.subr.mxu0 0.0
  %179 = vmatpush2.msra.mxu0 0.0
  %180 = vmatprep.subr.mxu0 0.0
  %181 = vmatpush2.msra.mxu0 0.0
  %182 = vmatprep.subr.mxu0 0.0
  %183 = vmatpush2.msra.mxu0 0.0
  %184 = vmatprep.subr.mxu0 0.0
  %185 = vmatpush2.msra.mxu0 0.0
  %186 = vmatprep.subr.mxu0 0.0
  %187 = vmatpush2.msra.mxu0 0.0
  %188 = vmatprep.subr.mxu0 0.0
  %189 = vmatpush2.msra.mxu0 0.0
  %190 = vmatprep.subr.mxu0 0.0
  %191 = vmatpush2.msra.mxu0 0.0
  %192 = vmatprep.subr.mxu0 0.0
  %193 = vmatpush2.msra.mxu0 0.0
  %194 = vmatprep.subr.mxu0 0.0
  %195 = vmatpush2.msra.mxu0 0.0
  %196 = vmatprep.subr.mxu0 0.0
  %197 = vmatpush2.msra.mxu0 0.0
  %198 = vmatprep.subr.mxu0 0.0
  %199 = vmatpush2.msra.mxu0 0.0
  %200 = vmatprep.subr.mxu0 0.0
  %201 = vmatpush2.msra.mxu0 0.0
  %202 = vmatprep.subr.mxu0 0.0
  %203 = vmatpush2.msra.mxu0 0.0
  %204 = vmatprep.subr.mxu0 0.0
  %205 = vmatpush2.msra.mxu0 0.0
  %206 = vmatprep.subr.mxu0 0.0
  %207 = vmatpush2.msra.mxu0 0.0
  %208 = vmatprep.mubr.f32.mxu0 0.0
  %209 = vmatmul.mubr.f32.gmra.mxu0 %v97
  %v210 = vpop.f32.mrf.mxu0
  %v211 = vadd.f32 0.0, %v210
  %v212 = vpop.f32.mrf.mxu0
  %213 = vmatprep.mubr.f32.mxu0 0.0
  %214 = vmatmul.mubr.f32.gmra.mxu0 %v100
  %v215 = vpop.f32.mrf.mxu0
  %v216 = vadd.f32 0.0, %v215
  %v217 = vpop.f32.mrf.mxu0
  %218 = vmatprep.mubr.f32.mxu0 0.0
  %219 = vmatmul.mubr.f32.gmra.mxu0 %v103
  %v220 = vpop.f32.mrf.mxu0
  %v221 = vadd.f32 0.0, %v220
  %v222 = vpop.f32.mrf.mxu0
  %223 = vmatprep.mubr.f32.mxu0 0.0
  %224 = vmatmul.mubr.f32.gmra.mxu0 %v106
  %v225 = vpop.f32.mrf.mxu0
  %v226 = vadd.f32 0.0, %v225
  %v227 = vpop.f32.mrf.mxu0
  %228 = vmatprep.mubr.f32.mxu0 0.0
  %229 = vmatmul.mubr.f32.gmra.mxu0 %v109
  %v230 = vpop.f32.mrf.mxu0
  %v231 = vadd.f32 0.0, %v230
  %v232 = vpop.f32.mrf.mxu0
  %233 = vmatprep.mubr.f32.mxu0 0.0
  %234 = vmatmul.mubr.f32.gmra.mxu0 %v112
  %v235 = vpop.f32.mrf.mxu0
  %v236 = vadd.f32 0.0, %v235
  %v237 = vpop.f32.mrf.mxu0
  %238 = vmatprep.mubr.f32.mxu0 0.0
  %239 = vmatmul.mubr.f32.gmra.mxu0 %v115
  %v240 = vpop.f32.mrf.mxu0
  %v241 = vadd.f32 0.0, %v240
  %v242 = vpop.f32.mrf.mxu0
  %243 = vmatprep.mubr.f32.mxu0 0.0
  %244 = vmatmul.mubr.f32.gmra.mxu0 %v118
  %v245 = vpop.f32.mrf.mxu0
  %v246 = vadd.f32 0.0, %v245
  %v247 = vpop.f32.mrf.mxu0
  %248 = vmatprep.mubr.f32.mxu0 0.0
  %249 = vmatmul.mubr.f32.gmra.mxu0 %v121
  %v250 = vpop.f32.mrf.mxu0
  %v251 = vadd.f32 0.0, %v250
  %v252 = vpop.f32.mrf.mxu0
  %253 = vmatprep.mubr.f32.mxu0 0.0
  %254 = vmatmul.mubr.f32.gmra.mxu0 %v124
  %v255 = vpop.f32.mrf.mxu0
  %v256 = vadd.f32 0.0, %v255
  %v257 = vpop.f32.mrf.mxu0
  %258 = vmatprep.mubr.f32.mxu0 0.0
  %259 = vmatmul.mubr.f32.gmra.mxu0 %v127
  %v260 = vpop.f32.mrf.mxu0
  %v261 = vadd.f32 0.0, %v260
  %v262 = vpop.f32.mrf.mxu0
  %263 = vmatprep.mubr.f32.mxu0 0.0
  %264 = vmatmul.mubr.f32.gmra.mxu0 %v130
  %v265 = vpop.f32.mrf.mxu0
  %v266 = vadd.f32 0.0, %v265
  %v267 = vpop.f32.mrf.mxu0
  %268 = vmatprep.mubr.f32.mxu0 0.0
  %269 = vmatmul.mubr.f32.gmra.mxu0 %v133
  %v270 = vpop.f32.mrf.mxu0
  %v271 = vadd.f32 0.0, %v270
  %v272 = vpop.f32.mrf.mxu0
  %273 = vmatprep.mubr.f32.mxu0 0.0
  %274 = vmatmul.mubr.f32.gmra.mxu0 %v136
  %v275 = vpop.f32.mrf.mxu0
  %v276 = vadd.f32 0.0, %v275
  %v277 = vpop.f32.mrf.mxu0
  %278 = vmatprep.mubr.f32.mxu0 0.0
  %279 = vmatmul.mubr.f32.gmra.mxu0 %v139
  %v280 = vpop.f32.mrf.mxu0
  %v281 = vadd.f32 0.0, %v280
  %v282 = vpop.f32.mrf.mxu0
  %283 = vmatprep.mubr.f32.mxu0 0.0
  %284 = vmatmul.mubr.f32.gmra.mxu0 %v142
  %v285 = vpop.f32.mrf.mxu0
  %v286 = vadd.f32 0.0, %v285
  %v287 = vpop.f32.mrf.mxu0
  %288 = vdwg.mxu0
  %v289 = vsub.f32 %v211, 2.0
  %v290 = vsub.f32 %v216, 2.0
  %v291 = vsub.f32 %v221, 2.0
  %v292 = vsub.f32 %v226, 2.0
  %v293 = vsub.f32 %v231, 2.0
  %v294 = vsub.f32 %v236, 2.0
  %v295 = vsub.f32 %v241, 2.0
  %v296 = vsub.f32 %v246, 2.0
  %v297 = vsub.f32 %v251, 2.0
  %v298 = vsub.f32 %v256, 2.0
  %v299 = vsub.f32 %v261, 2.0
  %v300 = vsub.f32 %v266, 2.0
  %v301 = vsub.f32 %v271, 2.0
  %v302 = vsub.f32 %v276, 2.0
  %v303 = vsub.f32 %v281, 2.0
  %v304 = vsub.f32 %v286, 2.0
  %v305 = vmul.f32 %v289, 1.442695
  %v306 = vpow.pop %v305
  %v307 = vmul.f32 %v290, 1.442695
  %v308 = vpow.pop %v307
  %v309 = vmul.f32 %v291, 1.442695
  %v310 = vpow.pop %v309
  %v311 = vmul.f32 %v292, 1.442695
  %v312 = vpow.pop %v311
  %v313 = vmul.f32 %v293, 1.442695
  %v314 = vpow.pop %v313
  %v315 = vmul.f32 %v294, 1.442695
  %v316 = vpow.pop %v315
  %v317 = vmul.f32 %v295, 1.442695
  %v318 = vpow.pop %v317
  %v319 = vmul.f32 %v296, 1.442695
  %v320 = vpow.pop %v319
  %v321 = vmul.f32 %v297, 1.442695
  %v322 = vpow.pop %v321
  %v323 = vmul.f32 %v298, 1.442695
  %v324 = vpow.pop %v323
  %v325 = vmul.f32 %v299, 1.442695
  %v326 = vpow.pop %v325
  %v327 = vmul.f32 %v300, 1.442695
  %v328 = vpow.pop %v327
  %v329 = vmul.f32 %v301, 1.442695
  %v330 = vpow.pop %v329
  %v331 = vmul.f32 %v302, 1.442695
  %v332 = vpow.pop %v331
  %v333 = vmul.f32 %v303, 1.442695
  %v334 = vpow.pop %v333
  %v335 = vmul.f32 %v304, 1.442695
  %v336 = vpow.pop %v335
  %v337 = vld [vmem:[%s2] sm:$0xff]
  %v338 = vld [vmem:[%s2 + $0x8] sm:$0xff]
  %v339 = vld [vmem:[%s2 + $0x10] sm:$0xff]
  %v340 = vld [vmem:[%s2 + $0x18] sm:$0xff]
  %v341 = vld [vmem:[%s2 + $0x20] sm:$0xff]
  %v342 = vld [vmem:[%s2 + $0x28] sm:$0xff]
  %v343 = vld [vmem:[%s2 + $0x30] sm:$0xff]
  %v344 = vld [vmem:[%s2 + $0x38] sm:$0xff]
  %v345 = vld [vmem:[%s2 + $0x40] sm:$0xff]
  %v346 = vld [vmem:[%s2 + $0x48] sm:$0xff]
  %v347 = vld [vmem:[%s2 + $0x50] sm:$0xff]
  %v348 = vld [vmem:[%s2 + $0x58] sm:$0xff]
  %v349 = vld [vmem:[%s2 + $0x60] sm:$0xff]
  %v350 = vld [vmem:[%s2 + $0x68] sm:$0xff]
  %v351 = vld [vmem:[%s2 + $0x70] sm:$0xff]
  %v352 = vld [vmem:[%s2 + $0x78] sm:$0xff]
  %353 = vset.pattern.permute.xlu0 0
  %354 = vperm.xlu0 %353, %v337
  %v355 = vpop.permute.xlu0 %354
  %356 = vset.pattern.permute.xlu0 0
  %357 = vperm.xlu0 %356, %v338
  %v358 = vpop.permute.xlu0 %357
  %359 = vset.pattern.permute.xlu0 0
  %360 = vperm.xlu0 %359, %v339
  %v361 = vpop.permute.xlu0 %360
  %362 = vset.pattern.permute.xlu0 0
  %363 = vperm.xlu0 %362, %v340
  %v364 = vpop.permute.xlu0 %363
  %365 = vset.pattern.permute.xlu0 0
  %366 = vperm.xlu0 %365, %v341
  %v367 = vpop.permute.xlu0 %366
  %368 = vset.pattern.permute.xlu0 0
  %369 = vperm.xlu0 %368, %v342
  %v370 = vpop.permute.xlu0 %369
  %371 = vset.pattern.permute.xlu0 0
  %372 = vperm.xlu0 %371, %v343
  %v373 = vpop.permute.xlu0 %372
  %374 = vset.pattern.permute.xlu0 0
  %375 = vperm.xlu0 %374, %v344
  %v376 = vpop.permute.xlu0 %375
  %377 = vset.pattern.permute.xlu0 0
  %378 = vperm.xlu0 %377, %v345
  %v379 = vpop.permute.xlu0 %378
  %380 = vset.pattern.permute.xlu0 0
  %381 = vperm.xlu0 %380, %v346
  %v382 = vpop.permute.xlu0 %381
  %383 = vset.pattern.permute.xlu0 0
  %384 = vperm.xlu0 %383, %v347
  %v385 = vpop.permute.xlu0 %384
  %386 = vset.pattern.permute.xlu0 0
  %387 = vperm.xlu0 %386, %v348
  %v388 = vpop.permute.xlu0 %387
  %389 = vset.pattern.permute.xlu0 0
  %390 = vperm.xlu0 %389, %v349
  %v391 = vpop.permute.xlu0 %390
  %392 = vset.pattern.permute.xlu0 0
  %393 = vperm.xlu0 %392, %v350
  %v394 = vpop.permute.xlu0 %393
  %395 = vset.pattern.permute.xlu0 0
  %396 = vperm.xlu0 %395, %v351
  %v397 = vpop.permute.xlu0 %396
  %398 = vset.pattern.permute.xlu0 0
  %399 = vperm.xlu0 %398, %v352
  %v400 = vpop.permute.xlu0 %399
  %v401 = vlaneseq
  %v402 = vshrl.u32 %v401, 7
  %v403 = vsub.s32 0, %v402
  %v404 = vrot.slane %v78, %v403
  %vm405 = vcmp.eq.s32.totalorder %v355, %v404
  %vm406 = vcmp.eq.s32.totalorder %v358, %v404
  %vm407 = vcmp.eq.s32.totalorder %v361, %v404
  %vm408 = vcmp.eq.s32.totalorder %v364, %v404
  %vm409 = vcmp.eq.s32.totalorder %v367, %v404
  %vm410 = vcmp.eq.s32.totalorder %v370, %v404
  %vm411 = vcmp.eq.s32.totalorder %v373, %v404
  %vm412 = vcmp.eq.s32.totalorder %v376, %v404
  %vm413 = vcmp.eq.s32.totalorder %v379, %v404
  %vm414 = vcmp.eq.s32.totalorder %v382, %v404
  %vm415 = vcmp.eq.s32.totalorder %v385, %v404
  %vm416 = vcmp.eq.s32.totalorder %v388, %v404
  %vm417 = vcmp.eq.s32.totalorder %v391, %v404
  %vm418 = vcmp.eq.s32.totalorder %v394, %v404
  %vm419 = vcmp.eq.s32.totalorder %v397, %v404
  %vm420 = vcmp.eq.s32.totalorder %v400, %v404
  %v421 = vsel %vm405, 1, 0
  %v422 = vsel %vm406, 1, 0
  %v423 = vsel %vm407, 1, 0
  %v424 = vsel %vm408, 1, 0
  %v425 = vsel %vm409, 1, 0
  %v426 = vsel %vm410, 1, 0
  %v427 = vsel %vm411, 1, 0
  %v428 = vsel %vm412, 1, 0
  %v429 = vsel %vm413, 1, 0
  %v430 = vsel %vm414, 1, 0
  %v431 = vsel %vm415, 1, 0
  %v432 = vsel %vm416, 1, 0
  %v433 = vsel %vm417, 1, 0
  %v434 = vsel %vm418, 1, 0
  %v435 = vsel %vm419, 1, 0
  %v436 = vsel %vm420, 1, 0
  %v437 = vcvt.s32.f32 %v421
  %v438 = vcvt.s32.f32 %v422
  %v439 = vcvt.s32.f32 %v423
  %v440 = vcvt.s32.f32 %v424
  %v441 = vcvt.s32.f32 %v425
  %v442 = vcvt.s32.f32 %v426
  %v443 = vcvt.s32.f32 %v427
  %v444 = vcvt.s32.f32 %v428
  %v445 = vcvt.s32.f32 %v429
  %v446 = vcvt.s32.f32 %v430
  %v447 = vcvt.s32.f32 %v431
  %v448 = vcvt.s32.f32 %v432
  %v449 = vcvt.s32.f32 %v433
  %v450 = vcvt.s32.f32 %v434
  %v451 = vcvt.s32.f32 %v435
  %v452 = vcvt.s32.f32 %v436
  %s453 = smul.u32 0, 128
  %s454 = sadd.s32 %s69, 128
  %p455 = scmp.lt.s32.totalorder %s453, %s454
  %s456 = sadd.s32 %s453, 128
  %p457 = scmp.lt.s32.totalorder %s69, %s456
  %p458 = pnand %p455, %p457
  %p459 = pneg %p458
  // Predicated region
  $region22: #{tpu_custom_call.1} parent=0 // pred_check
    _
  $region23: #{tpu_custom_call.1} parent=0 // pred_check_branch
    %461 = sbr.rel (%p458) target = $region25
  $region24: #{tpu_custom_call.1} parent=0 // pred_region
    %v462 = vlaneseq
    %v463 = vshrl.u32 %v462, 7
    %v464 = vadd.s32 %v463, 8
    %v465 = vadd.s32 %v463, 16
    %v466 = vadd.s32 %v463, 24
    %v467 = vadd.s32 %v463, 32
    %v468 = vadd.s32 %v463, 40
    %v469 = vadd.s32 %v463, 48
    %v470 = vadd.s32 %v463, 56
    %v471 = vadd.s32 %v463, 64
    %v472 = vadd.s32 %v463, 72
    %v473 = vadd.s32 %v463, 80
    %v474 = vadd.s32 %v463, 88
    %v475 = vadd.s32 %v463, 96
    %v476 = vadd.s32 %v463, 104
    %v477 = vadd.s32 %v463, 112
    %v478 = vadd.s32 %v463, 120
    %v479 = vstv %s453
    %v480 = vadd.s32 %v463, %v479
    %v481 = vadd.s32 %v464, %v479
    %v482 = vadd.s32 %v465, %v479
    %v483 = vadd.s32 %v466, %v479
    %v484 = vadd.s32 %v467, %v479
    %v485 = vadd.s32 %v468, %v479
    %v486 = vadd.s32 %v469, %v479
    %v487 = vadd.s32 %v470, %v479
    %v488 = vadd.s32 %v471, %v479
    %v489 = vadd.s32 %v472, %v479
    %v490 = vadd.s32 %v473, %v479
    %v491 = vadd.s32 %v474, %v479
    %v492 = vadd.s32 %v475, %v479
    %v493 = vadd.s32 %v476, %v479
    %v494 = vadd.s32 %v477, %v479
    %v495 = vadd.s32 %v478, %v479
    %v496 = vlaneseq
    %v497 = vand.u32 %v496, 127
    %v498 = vstv %s69
    %v499 = vadd.s32 %v497, %v498
    %vm500 = vcmp.ne.s32.totalorder %v480, %v499
    %vm501 = vcmp.ne.s32.totalorder %v481, %v499
    %vm502 = vcmp.ne.s32.totalorder %v482, %v499
    %vm503 = vcmp.ne.s32.totalorder %v483, %v499
    %vm504 = vcmp.ne.s32.totalorder %v484, %v499
    %vm505 = vcmp.ne.s32.totalorder %v485, %v499
    %vm506 = vcmp.ne.s32.totalorder %v486, %v499
    %vm507 = vcmp.ne.s32.totalorder %v487, %v499
    %vm508 = vcmp.ne.s32.totalorder %v488, %v499
    %vm509 = vcmp.ne.s32.totalorder %v489, %v499
    %vm510 = vcmp.ne.s32.totalorder %v490, %v499
    %vm511 = vcmp.ne.s32.totalorder %v491, %v499
    %vm512 = vcmp.ne.s32.totalorder %v492, %v499
    %vm513 = vcmp.ne.s32.totalorder %v493, %v499
    %vm514 = vcmp.ne.s32.totalorder %v494, %v499
    %vm515 = vcmp.ne.s32.totalorder %v495, %v499
    %v516 = vsel %vm500, 1, 0
    %v517 = vsel %vm501, 1, 0
    %v518 = vsel %vm502, 1, 0
    %v519 = vsel %vm503, 1, 0
    %v520 = vsel %vm504, 1, 0
    %v521 = vsel %vm505, 1, 0
    %v522 = vsel %vm506, 1, 0
    %v523 = vsel %vm507, 1, 0
    %v524 = vsel %vm508, 1, 0
    %v525 = vsel %vm509, 1, 0
    %v526 = vsel %vm510, 1, 0
    %v527 = vsel %vm511, 1, 0
    %v528 = vsel %vm512, 1, 0
    %v529 = vsel %vm513, 1, 0
    %v530 = vsel %vm514, 1, 0
    %v531 = vsel %vm515, 1, 0
    %v532 = vcvt.s32.f32 %v516
    %v533 = vcvt.s32.f32 %v517
    %v534 = vcvt.s32.f32 %v518
    %v535 = vcvt.s32.f32 %v519
    %v536 = vcvt.s32.f32 %v520
    %v537 = vcvt.s32.f32 %v521
    %v538 = vcvt.s32.f32 %v522
    %v539 = vcvt.s32.f32 %v523
    %v540 = vcvt.s32.f32 %v524
    %v541 = vcvt.s32.f32 %v525
    %v542 = vcvt.s32.f32 %v526
    %v543 = vcvt.s32.f32 %v527
    %v544 = vcvt.s32.f32 %v528
    %v545 = vcvt.s32.f32 %v529
    %v546 = vcvt.s32.f32 %v530
    %v547 = vcvt.s32.f32 %v531
    %v548 = vmul.f32 %v437, %v532
    %v549 = vmul.f32 %v438, %v533
    %v550 = vmul.f32 %v439, %v534
    %v551 = vmul.f32 %v440, %v535
    %v552 = vmul.f32 %v441, %v536
    %v553 = vmul.f32 %v442, %v537
    %v554 = vmul.f32 %v443, %v538
    %v555 = vmul.f32 %v444, %v539
    %v556 = vmul.f32 %v445, %v540
    %v557 = vmul.f32 %v446, %v541
    %v558 = vmul.f32 %v447, %v542
    %v559 = vmul.f32 %v448, %v543
    %v560 = vmul.f32 %v449, %v544
    %v561 = vmul.f32 %v450, %v545
    %v562 = vmul.f32 %v451, %v546
    %v563 = vmul.f32 %v452, %v547
    %v564 = vmul.f32 %v306, %v532
    %v565 = vmul.f32 %v308, %v533
    %v566 = vmul.f32 %v310, %v534
    %v567 = vmul.f32 %v312, %v535
    %v568 = vmul.f32 %v314, %v536
    %v569 = vmul.f32 %v316, %v537
    %v570 = vmul.f32 %v318, %v538
    %v571 = vmul.f32 %v320, %v539
    %v572 = vmul.f32 %v322, %v540
    %v573 = vmul.f32 %v324, %v541
    %v574 = vmul.f32 %v326, %v542
    %v575 = vmul.f32 %v328, %v543
    %v576 = vmul.f32 %v330, %v544
    %v577 = vmul.f32 %v332, %v545
    %v578 = vmul.f32 %v334, %v546
    %v579 = vmul.f32 %v336, %v547
    %v580 = vmul.f32 %v548, %v211
    %v581 = vmul.f32 %v549, %v216
    %v582 = vmul.f32 %v550, %v221
    %v583 = vmul.f32 %v551, %v226
    %v584 = vmul.f32 %v552, %v231
    %v585 = vmul.f32 %v553, %v236
    %v586 = vmul.f32 %v554, %v241
    %v587 = vmul.f32 %v555, %v246
    %v588 = vmul.f32 %v556, %v251
    %v589 = vmul.f32 %v557, %v256
    %v590 = vmul.f32 %v558, %v261
    %v591 = vmul.f32 %v559, %v266
    %v592 = vmul.f32 %v560, %v271
    %v593 = vmul.f32 %v561, %v276
    %v594 = vmul.f32 %v562, %v281
    %v595 = vmul.f32 %v563, %v286
    %v596 = vld [vmem:[#allocation2] sm:$0xff]
    %v597 = vld [vmem:[#allocation2 + $0x8] sm:$0xff]
    %v598 = vld [vmem:[#allocation2 + $0x10] sm:$0xff]
    %v599 = vld [vmem:[#allocation2 + $0x18] sm:$0xff]
    %v600 = vld [vmem:[#allocation2 + $0x20] sm:$0xff]
    %v601 = vld [vmem:[#allocation2 + $0x28] sm:$0xff]
    %v602 = vld [vmem:[#allocation2 + $0x30] sm:$0xff]
    %v603 = vld [vmem:[#allocation2 + $0x38] sm:$0xff]
    %v604 = vld [vmem:[#allocation2 + $0x40] sm:$0xff]
    %v605 = vld [vmem:[#allocation2 + $0x48] sm:$0xff]
    %v606 = vld [vmem:[#allocation2 + $0x50] sm:$0xff]
    %v607 = vld [vmem:[#allocation2 + $0x58] sm:$0xff]
    %v608 = vld [vmem:[#allocation2 + $0x60] sm:$0xff]
    %v609 = vld [vmem:[#allocation2 + $0x68] sm:$0xff]
    %v610 = vld [vmem:[#allocation2 + $0x70] sm:$0xff]
    %v611 = vld [vmem:[#allocation2 + $0x78] sm:$0xff]
    %v612 = vadd.f32 %v596, %v564
    %v613 = vadd.f32 %v597, %v565
    %v614 = vadd.f32 %v598, %v566
    %v615 = vadd.f32 %v599, %v567
    %v616 = vadd.f32 %v600, %v568
    %v617 = vadd.f32 %v601, %v569
    %v618 = vadd.f32 %v602, %v570
    %v619 = vadd.f32 %v603, %v571
    %v620 = vadd.f32 %v604, %v572
    %v621 = vadd.f32 %v605, %v573
    %v622 = vadd.f32 %v606, %v574
    %v623 = vadd.f32 %v607, %v575
    %v624 = vadd.f32 %v608, %v576
    %v625 = vadd.f32 %v609, %v577
    %v626 = vadd.f32 %v610, %v578
    %v627 = vadd.f32 %v611, %v579
    %628 = vst [vmem:[#allocation2] sm:$0xff] %v612
    %629 = vst [vmem:[#allocation2 + $0x8] sm:$0xff] %v613
    %630 = vst [vmem:[#allocation2 + $0x10] sm:$0xff] %v614
    %631 = vst [vmem:[#allocation2 + $0x18] sm:$0xff] %v615
    %632 = vst [vmem:[#allocation2 + $0x20] sm:$0xff] %v616
    %633 = vst [vmem:[#allocation2 + $0x28] sm:$0xff] %v617
    %634 = vst [vmem:[#allocation2 + $0x30] sm:$0xff] %v618
    %635 = vst [vmem:[#allocation2 + $0x38] sm:$0xff] %v619
    %636 = vst [vmem:[#allocation2 + $0x40] sm:$0xff] %v620
    %637 = vst [vmem:[#allocation2 + $0x48] sm:$0xff] %v621
    %638 = vst [vmem:[#allocation2 + $0x50] sm:$0xff] %v622
    %639 = vst [vmem:[#allocation2 + $0x58] sm:$0xff] %v623
    %640 = vst [vmem:[#allocation2 + $0x60] sm:$0xff] %v624
    %641 = vst [vmem:[#allocation2 + $0x68] sm:$0xff] %v625
    %642 = vst [vmem:[#allocation2 + $0x70] sm:$0xff] %v626
    %643 = vst [vmem:[#allocation2 + $0x78] sm:$0xff] %v627
    %v644 = vld [vmem:[#allocation3] sm:$0xff]
    %v645 = vld [vmem:[#allocation3 + $0x8] sm:$0xff]
    %v646 = vld [vmem:[#allocation3 + $0x10] sm:$0xff]
    %v647 = vld [vmem:[#allocation3 + $0x18] sm:$0xff]
    %v648 = vld [vmem:[#allocation3 + $0x20] sm:$0xff]
    %v649 = vld [vmem:[#allocation3 + $0x28] sm:$0xff]
    %v650 = vld [vmem:[#allocation3 + $0x30] sm:$0xff]
    %v651 = vld [vmem:[#allocation3 + $0x38] sm:$0xff]
    %v652 = vld [vmem:[#allocation3 + $0x40] sm:$0xff]
    %v653 = vld [vmem:[#allocation3 + $0x48] sm:$0xff]
    %v654 = vld [vmem:[#allocation3 + $0x50] sm:$0xff]
    %v655 = vld [vmem:[#allocation3 + $0x58] sm:$0xff]
    %v656 = vld [vmem:[#allocation3 + $0x60] sm:$0xff]
    %v657 = vld [vmem:[#allocation3 + $0x68] sm:$0xff]
    %v658 = vld [vmem:[#allocation3 + $0x70] sm:$0xff]
    %v659 = vld [vmem:[#allocation3 + $0x78] sm:$0xff]
    %v660 = vadd.f32 %v644, %v580
    %v661 = vadd.f32 %v645, %v581
    %v662 = vadd.f32 %v646, %v582
    %v663 = vadd.f32 %v647, %v583
    %v664 = vadd.f32 %v648, %v584
    %v665 = vadd.f32 %v649, %v585
    %v666 = vadd.f32 %v650, %v586
    %v667 = vadd.f32 %v651, %v587
    %v668 = vadd.f32 %v652, %v588
    %v669 = vadd.f32 %v653, %v589
    %v670 = vadd.f32 %v654, %v590
    %v671 = vadd.f32 %v655, %v591
    %v672 = vadd.f32 %v656, %v592
    %v673 = vadd.f32 %v657, %v593
    %v674 = vadd.f32 %v658, %v594
    %v675 = vadd.f32 %v659, %v595
    %676 = vst [vmem:[#allocation3] sm:$0xff] %v660
    %677 = vst [vmem:[#allocation3 + $0x8] sm:$0xff] %v661
    %678 = vst [vmem:[#allocation3 + $0x10] sm:$0xff] %v662
    %679 = vst [vmem:[#allocation3 + $0x18] sm:$0xff] %v663
    %680 = vst [vmem:[#allocation3 + $0x20] sm:$0xff] %v664
    %681 = vst [vmem:[#allocation3 + $0x28] sm:$0xff] %v665
    %682 = vst [vmem:[#allocation3 + $0x30] sm:$0xff] %v666
    %683 = vst [vmem:[#allocation3 + $0x38] sm:$0xff] %v667
    %684 = vst [vmem:[#allocation3 + $0x40] sm:$0xff] %v668
    %685 = vst [vmem:[#allocation3 + $0x48] sm:$0xff] %v669
    %686 = vst [vmem:[#allocation3 + $0x50] sm:$0xff] %v670
    %687 = vst [vmem:[#allocation3 + $0x58] sm:$0xff] %v671
    %688 = vst [vmem:[#allocation3 + $0x60] sm:$0xff] %v672
    %689 = vst [vmem:[#allocation3 + $0x68] sm:$0xff] %v673
    %690 = vst [vmem:[#allocation3 + $0x70] sm:$0xff] %v674
    %691 = vst [vmem:[#allocation3 + $0x78] sm:$0xff] %v675
    %v692 = vld [vmem:[#allocation4] sm:$0xff]
    %v693 = vld [vmem:[#allocation4 + $0x8] sm:$0xff]
    %v694 = vld [vmem:[#allocation4 + $0x10] sm:$0xff]
    %v695 = vld [vmem:[#allocation4 + $0x18] sm:$0xff]
    %v696 = vld [vmem:[#allocation4 + $0x20] sm:$0xff]
    %v697 = vld [vmem:[#allocation4 + $0x28] sm:$0xff]
    %v698 = vld [vmem:[#allocation4 + $0x30] sm:$0xff]
    %v699 = vld [vmem:[#allocation4 + $0x38] sm:$0xff]
    %v700 = vld [vmem:[#allocation4 + $0x40] sm:$0xff]
    %v701 = vld [vmem:[#allocation4 + $0x48] sm:$0xff]
    %v702 = vld [vmem:[#allocation4 + $0x50] sm:$0xff]
    %v703 = vld [vmem:[#allocation4 + $0x58] sm:$0xff]
    %v704 = vld [vmem:[#allocation4 + $0x60] sm:$0xff]
    %v705 = vld [vmem:[#allocation4 + $0x68] sm:$0xff]
    %v706 = vld [vmem:[#allocation4 + $0x70] sm:$0xff]
    %v707 = vld [vmem:[#allocation4 + $0x78] sm:$0xff]
    %v708 = vadd.f32 %v692, %v548
    %v709 = vadd.f32 %v693, %v549
    %v710 = vadd.f32 %v694, %v550
    %v711 = vadd.f32 %v695, %v551
    %v712 = vadd.f32 %v696, %v552
    %v713 = vadd.f32 %v697, %v553
    %v714 = vadd.f32 %v698, %v554
    %v715 = vadd.f32 %v699, %v555
    %v716 = vadd.f32 %v700, %v556
    %v717 = vadd.f32 %v701, %v557
    %v718 = vadd.f32 %v702, %v558
    %v719 = vadd.f32 %v703, %v559
    %v720 = vadd.f32 %v704, %v560
    %v721 = vadd.f32 %v705, %v561
    %v722 = vadd.f32 %v706, %v562
    %v723 = vadd.f32 %v707, %v563
    %724 = vst [vmem:[#allocation4] sm:$0xff] %v708
    %725 = vst [vmem:[#allocation4 + $0x8] sm:$0xff] %v709
    %726 = vst [vmem:[#allocation4 + $0x10] sm:$0xff] %v710
    %727 = vst [vmem:[#allocation4 + $0x18] sm:$0xff] %v711
    %728 = vst [vmem:[#allocation4 + $0x20] sm:$0xff] %v712
    %729 = vst [vmem:[#allocation4 + $0x28] sm:$0xff] %v713
    %730 = vst [vmem:[#allocation4 + $0x30] sm:$0xff] %v714
    %731 = vst [vmem:[#allocation4 + $0x38] sm:$0xff] %v715
    %732 = vst [vmem:[#allocation4 + $0x40] sm:$0xff] %v716
    %733 = vst [vmem:[#allocation4 + $0x48] sm:$0xff] %v717
    %734 = vst [vmem:[#allocation4 + $0x50] sm:$0xff] %v718
    %735 = vst [vmem:[#allocation4 + $0x58] sm:$0xff] %v719
    %736 = vst [vmem:[#allocation4 + $0x60] sm:$0xff] %v720
    %737 = vst [vmem:[#allocation4 + $0x68] sm:$0xff] %v721
    %738 = vst [vmem:[#allocation4 + $0x70] sm:$0xff] %v722
    %739 = vst [vmem:[#allocation4 + $0x78] sm:$0xff] %v723
  $region25: #{tpu_custom_call.1} parent=0 // pred_fallthru
    _
  %p740 = pneg %p459
  // Predicated region
  $region26: #{tpu_custom_call.1} parent=0 // pred_check
    _
  $region27: #{tpu_custom_call.1} parent=0 // pred_check_branch
    %742 = sbr.rel (%p459) target = $region29
  $region28: #{tpu_custom_call.1} parent=0 // pred_region
    %v743 = vmul.f32 %v437, %v211
    %v744 = vmul.f32 %v438, %v216
    %v745 = vmul.f32 %v439, %v221
    %v746 = vmul.f32 %v440, %v226
    %v747 = vmul.f32 %v441, %v231
    %v748 = vmul.f32 %v442, %v236
    %v749 = vmul.f32 %v443, %v241
    %v750 = vmul.f32 %v444, %v246
    %v751 = vmul.f32 %v445, %v251
    %v752 = vmul.f32 %v446, %v256
    %v753 = vmul.f32 %v447, %v261
    %v754 = vmul.f32 %v448, %v266
    %v755 = vmul.f32 %v449, %v271
    %v756 = vmul.f32 %v450, %v276
    %v757 = vmul.f32 %v451, %v281
    %v758 = vmul.f32 %v452, %v286
    %v759 = vld [vmem:[#allocation2] sm:$0xff]
    %v760 = vld [vmem:[#allocation2 + $0x8] sm:$0xff]
    %v761 = vld [vmem:[#allocation2 + $0x10] sm:$0xff]
    %v762 = vld [vmem:[#allocation2 + $0x18] sm:$0xff]
    %v763 = vld [vmem:[#allocation2 + $0x20] sm:$0xff]
    %v764 = vld [vmem:[#allocation2 + $0x28] sm:$0xff]
    %v765 = vld [vmem:[#allocation2 + $0x30] sm:$0xff]
    %v766 = vld [vmem:[#allocation2 + $0x38] sm:$0xff]
    %v767 = vld [vmem:[#allocation2 + $0x40] sm:$0xff]
    %v768 = vld [vmem:[#allocation2 + $0x48] sm:$0xff]
    %v769 = vld [vmem:[#allocation2 + $0x50] sm:$0xff]
    %v770 = vld [vmem:[#allocation2 + $0x58] sm:$0xff]
    %v771 = vld [vmem:[#allocation2 + $0x60] sm:$0xff]
    %v772 = vld [vmem:[#allocation2 + $0x68] sm:$0xff]
    %v773 = vld [vmem:[#allocation2 + $0x70] sm:$0xff]
    %v774 = vld [vmem:[#allocation2 + $0x78] sm:$0xff]
    %v775 = vadd.f32 %v759, %v306
    %v776 = vadd.f32 %v760, %v308
    %v777 = vadd.f32 %v761, %v310
    %v778 = vadd.f32 %v762, %v312
    %v779 = vadd.f32 %v763, %v314
    %v780 = vadd.f32 %v764, %v316
    %v781 = vadd.f32 %v765, %v318
    %v782 = vadd.f32 %v766, %v320
    %v783 = vadd.f32 %v767, %v322
    %v784 = vadd.f32 %v768, %v324
    %v785 = vadd.f32 %v769, %v326
    %v786 = vadd.f32 %v770, %v328
    %v787 = vadd.f32 %v771, %v330
    %v788 = vadd.f32 %v772, %v332
    %v789 = vadd.f32 %v773, %v334
    %v790 = vadd.f32 %v774, %v336
    %791 = vst [vmem:[#allocation2] sm:$0xff] %v775
    %792 = vst [vmem:[#allocation2 + $0x8] sm:$0xff] %v776
    %793 = vst [vmem:[#allocation2 + $0x10] sm:$0xff] %v777
    %794 = vst [vmem:[#allocation2 + $0x18] sm:$0xff] %v778
    %795 = vst [vmem:[#allocation2 + $0x20] sm:$0xff] %v779
    %796 = vst [vmem:[#allocation2 + $0x28] sm:$0xff] %v780
    %797 = vst [vmem:[#allocation2 + $0x30] sm:$0xff] %v781
    %798 = vst [vmem:[#allocation2 + $0x38] sm:$0xff] %v782
    %799 = vst [vmem:[#allocation2 + $0x40] sm:$0xff] %v783
    %800 = vst [vmem:[#allocation2 + $0x48] sm:$0xff] %v784
    %801 = vst [vmem:[#allocation2 + $0x50] sm:$0xff] %v785
    %802 = vst [vmem:[#allocation2 + $0x58] sm:$0xff] %v786
    %803 = vst [vmem:[#allocation2 + $0x60] sm:$0xff] %v787
    %804 = vst [vmem:[#allocation2 + $0x68] sm:$0xff] %v788
    %805 = vst [vmem:[#allocation2 + $0x70] sm:$0xff] %v789
    %806 = vst [vmem:[#allocation2 + $0x78] sm:$0xff] %v790
    %v807 = vld [vmem:[#allocation3] sm:$0xff]
    %v808 = vld [vmem:[#allocation3 + $0x8] sm:$0xff]
    %v809 = vld [vmem:[#allocation3 + $0x10] sm:$0xff]
    %v810 = vld [vmem:[#allocation3 + $0x18] sm:$0xff]
    %v811 = vld [vmem:[#allocation3 + $0x20] sm:$0xff]
    %v812 = vld [vmem:[#allocation3 + $0x28] sm:$0xff]
    %v813 = vld [vmem:[#allocation3 + $0x30] sm:$0xff]
    %v814 = vld [vmem:[#allocation3 + $0x38] sm:$0xff]
    %v815 = vld [vmem:[#allocation3 + $0x40] sm:$0xff]
    %v816 = vld [vmem:[#allocation3 + $0x48] sm:$0xff]
    %v817 = vld [vmem:[#allocation3 + $0x50] sm:$0xff]
    %v818 = vld [vmem:[#allocation3 + $0x58] sm:$0xff]
    %v819 = vld [vmem:[#allocation3 + $0x60] sm:$0xff]
    %v820 = vld [vmem:[#allocation3 + $0x68] sm:$0xff]
    %v821 = vld [vmem:[#allocation3 + $0x70] sm:$0xff]
    %v822 = vld [vmem:[#allocation3 + $0x78] sm:$0xff]
    %v823 = vadd.f32 %v807, %v743
    %v824 = vadd.f32 %v808, %v744
    %v825 = vadd.f32 %v809, %v745
    %v826 = vadd.f32 %v810, %v746
    %v827 = vadd.f32 %v811, %v747
    %v828 = vadd.f32 %v812, %v748
    %v829 = vadd.f32 %v813, %v749
    %v830 = vadd.f32 %v814, %v750
    %v831 = vadd.f32 %v815, %v751
    %v832 = vadd.f32 %v816, %v752
    %v833 = vadd.f32 %v817, %v753
    %v834 = vadd.f32 %v818, %v754
    %v835 = vadd.f32 %v819, %v755
    %v836 = vadd.f32 %v820, %v756
    %v837 = vadd.f32 %v821, %v757
    %v838 = vadd.f32 %v822, %v758
    %839 = vst [vmem:[#allocation3] sm:$0xff] %v823
    %840 = vst [vmem:[#allocation3 + $0x8] sm:$0xff] %v824
    %841 = vst [vmem:[#allocation3 + $0x10] sm:$0xff] %v825
    %842 = vst [vmem:[#allocation3 + $0x18] sm:$0xff] %v826
    %843 = vst [vmem:[#allocation3 + $0x20] sm:$0xff] %v827
    %844 = vst [vmem:[#allocation3 + $0x28] sm:$0xff] %v828
    %845 = vst [vmem:[#allocation3 + $0x30] sm:$0xff] %v829
    %846 = vst [vmem:[#allocation3 + $0x38] sm:$0xff] %v830
    %847 = vst [vmem:[#allocation3 + $0x40] sm:$0xff] %v831
    %848 = vst [vmem:[#allocation3 + $0x48] sm:$0xff] %v832
    %849 = vst [vmem:[#allocation3 + $0x50] sm:$0xff] %v833
    %850 = vst [vmem:[#allocation3 + $0x58] sm:$0xff] %v834
    %851 = vst [vmem:[#allocation3 + $0x60] sm:$0xff] %v835
    %852 = vst [vmem:[#allocation3 + $0x68] sm:$0xff] %v836
    %853 = vst [vmem:[#allocation3 + $0x70] sm:$0xff] %v837
    %854 = vst [vmem:[#allocation3 + $0x78] sm:$0xff] %v838
    %v855 = vld [vmem:[#allocation4] sm:$0xff]
    %v856 = vld [vmem:[#allocation4 + $0x8] sm:$0xff]
    %v857 = vld [vmem:[#allocation4 + $0x10] sm:$0xff]
    %v858 = vld [vmem:[#allocation4 + $0x18] sm:$0xff]
    %v859 = vld [vmem:[#allocation4 + $0x20] sm:$0xff]
    %v860 = vld [vmem:[#allocation4 + $0x28] sm:$0xff]
    %v861 = vld [vmem:[#allocation4 + $0x30] sm:$0xff]
    %v862 = vld [vmem:[#allocation4 + $0x38] sm:$0xff]
    %v863 = vld [vmem:[#allocation4 + $0x40] sm:$0xff]
    %v864 = vld [vmem:[#allocation4 + $0x48] sm:$0xff]
    %v865 = vld [vmem:[#allocation4 + $0x50] sm:$0xff]
    %v866 = vld [vmem:[#allocation4 + $0x58] sm:$0xff]
    %v867 = vld [vmem:[#allocation4 + $0x60] sm:$0xff]
    %v868 = vld [vmem:[#allocation4 + $0x68] sm:$0xff]
    %v869 = vld [vmem:[#allocation4 + $0x70] sm:$0xff]
    %v870 = vld [vmem:[#allocation4 + $0x78] sm:$0xff]
    %v871 = vadd.f32 %v855, %v437
    %v872 = vadd.f32 %v856, %v438
    %v873 = vadd.f32 %v857, %v439
    %v874 = vadd.f32 %v858, %v440
    %v875 = vadd.f32 %v859, %v441
    %v876 = vadd.f32 %v860, %v442
    %v877 = vadd.f32 %v861, %v443
    %v878 = vadd.f32 %v862, %v444
    %v879 = vadd.f32 %v863, %v445
    %v880 = vadd.f32 %v864, %v446
    %v881 = vadd.f32 %v865, %v447
    %v882 = vadd.f32 %v866, %v448
    %v883 = vadd.f32 %v867, %v449
    %v884 = vadd.f32 %v868, %v450
    %v885 = vadd.f32 %v869, %v451
    %v886 = vadd.f32 %v870, %v452
    %887 = vst [vmem:[#allocation4] sm:$0xff] %v871
    %888 = vst [vmem:[#allocation4 + $0x8] sm:$0xff] %v872
    %889 = vst [vmem:[#allocation4 + $0x10] sm:$0xff] %v873
    %890 = vst [vmem:[#allocation4 + $0x18] sm:$0xff] %v874
    %891 = vst [vmem:[#allocation4 + $0x20] sm:$0xff] %v875
    %892 = vst [vmem:[#allocation4 + $0x28] sm:$0xff] %v876
    %893 = vst [vmem:[#allocation4 + $0x30] sm:$0xff] %v877
    %894 = vst [vmem:[#allocation4 + $0x38] sm:$0xff] %v878
    %895 = vst [vmem:[#allocation4 + $0x40] sm:$0xff] %v879
    %896 = vst [vmem:[#allocation4 + $0x48] sm:$0xff] %v880
    %897 = vst [vmem:[#allocation4 + $0x50] sm:$0xff] %v881
    %898 = vst [vmem:[#allocation4 + $0x58] sm:$0xff] %v882
    %899 = vst [vmem:[#allocation4 + $0x60] sm:$0xff] %v883
    %900 = vst [vmem:[#allocation4 + $0x68] sm:$0xff] %v884
    %901 = vst [vmem:[#allocation4 + $0x70] sm:$0xff] %v885
    %902 = vst [vmem:[#allocation4 + $0x78] sm:$0xff] %v886
  $region29: #{tpu_custom_call.1} parent=0 // pred_fallthru
    _
  // Predicated region
  $region30: #{tpu_custom_call.1} parent=0 // pred_check
    %p903 = pneg %p17
  $region31: #{tpu_custom_call.1} parent=0 // pred_check_branch
    %905 = sbr.rel (%p903) target = $region33
  $region32: #{tpu_custom_call.1} parent=0 // pred_region
    %v906 = vld [vmem:[#allocation2] sm:$0xff]
    %v907 = vld [vmem:[#allocation2 + $0x8] sm:$0xff]
    %v908 = vld [vmem:[#allocation2 + $0x10] sm:$0xff]
    %v909 = vld [vmem:[#allocation2 + $0x18] sm:$0xff]
    %v910 = vld [vmem:[#allocation2 + $0x20] sm:$0xff]
    %v911 = vld [vmem:[#allocation2 + $0x28] sm:$0xff]
    %v912 = vld [vmem:[#allocation2 + $0x30] sm:$0xff]
    %v913 = vld [vmem:[#allocation2 + $0x38] sm:$0xff]
    %v914 = vld [vmem:[#allocation2 + $0x40] sm:$0xff]
    %v915 = vld [vmem:[#allocation2 + $0x48] sm:$0xff]
    %v916 = vld [vmem:[#allocation2 + $0x50] sm:$0xff]
    %v917 = vld [vmem:[#allocation2 + $0x58] sm:$0xff]
    %v918 = vld [vmem:[#allocation2 + $0x60] sm:$0xff]
    %v919 = vld [vmem:[#allocation2 + $0x68] sm:$0xff]
    %v920 = vld [vmem:[#allocation2 + $0x70] sm:$0xff]
    %v921 = vld [vmem:[#allocation2 + $0x78] sm:$0xff]
    %922 = vadd.xlane.f32.xlu0 %v906
    %v923 = vpop.xlane.xlu0 %922
    %924 = vadd.xlane.f32.xlu0 %v907
    %v925 = vpop.xlane.xlu0 %924
    %926 = vadd.xlane.f32.xlu0 %v908
    %v927 = vpop.xlane.xlu0 %926
    %928 = vadd.xlane.f32.xlu0 %v909
    %v929 = vpop.xlane.xlu0 %928
    %930 = vadd.xlane.f32.xlu0 %v910
    %v931 = vpop.xlane.xlu0 %930
    %932 = vadd.xlane.f32.xlu0 %v911
    %v933 = vpop.xlane.xlu0 %932
    %934 = vadd.xlane.f32.xlu0 %v912
    %v935 = vpop.xlane.xlu0 %934
    %936 = vadd.xlane.f32.xlu0 %v913
    %v937 = vpop.xlane.xlu0 %936
    %938 = vadd.xlane.f32.xlu0 %v914
    %v939 = vpop.xlane.xlu0 %938
    %940 = vadd.xlane.f32.xlu0 %v915
    %v941 = vpop.xlane.xlu0 %940
    %942 = vadd.xlane.f32.xlu0 %v916
    %v943 = vpop.xlane.xlu0 %942
    %944 = vadd.xlane.f32.xlu0 %v917
    %v945 = vpop.xlane.xlu0 %944
    %946 = vadd.xlane.f32.xlu0 %v918
    %v947 = vpop.xlane.xlu0 %946
    %948 = vadd.xlane.f32.xlu0 %v919
    %v949 = vpop.xlane.xlu0 %948
    %950 = vadd.xlane.f32.xlu0 %v920
    %v951 = vpop.xlane.xlu0 %950
    %952 = vadd.xlane.f32.xlu0 %v921
    %v953 = vpop.xlane.xlu0 %952
    %v954 = vsub.f32 %v923, 15.157552
    %v955 = vsub.f32 %v925, 15.157552
    %v956 = vsub.f32 %v927, 15.157552
    %v957 = vsub.f32 %v929, 15.157552
    %v958 = vsub.f32 %v931, 15.157552
    %v959 = vsub.f32 %v933, 15.157552
    %v960 = vsub.f32 %v935, 15.157552
    %v961 = vsub.f32 %v937, 15.157552
    %v962 = vsub.f32 %v939, 15.157552
    %v963 = vsub.f32 %v941, 15.157552
    %v964 = vsub.f32 %v943, 15.157552
    %v965 = vsub.f32 %v945, 15.157552
    %v966 = vsub.f32 %v947, 15.157552
    %v967 = vsub.f32 %v949, 15.157552
    %v968 = vsub.f32 %v951, 15.157552
    %v969 = vsub.f32 %v953, 15.157552
    %v970 = vld [vmem:[#allocation3] sm:$0xff]
    %v971 = vld [vmem:[#allocation3 + $0x8] sm:$0xff]
    %v972 = vld [vmem:[#allocation3 + $0x10] sm:$0xff]
    %v973 = vld [vmem:[#allocation3 + $0x18] sm:$0xff]
    %v974 = vld [vmem:[#allocation3 + $0x20] sm:$0xff]
    %v975 = vld [vmem:[#allocation3 + $0x28] sm:$0xff]
    %v976 = vld [vmem:[#allocation3 + $0x30] sm:$0xff]
    %v977 = vld [vmem:[#allocation3 + $0x38] sm:$0xff]
    %v978 = vld [vmem:[#allocation3 + $0x40] sm:$0xff]
    %v979 = vld [vmem:[#allocation3 + $0x48] sm:$0xff]
    %v980 = vld [vmem:[#allocation3 + $0x50] sm:$0xff]
    %v981 = vld [vmem:[#allocation3 + $0x58] sm:$0xff]
    %v982 = vld [vmem:[#allocation3 + $0x60] sm:$0xff]
    %v983 = vld [vmem:[#allocation3 + $0x68] sm:$0xff]
    %v984 = vld [vmem:[#allocation3 + $0x70] sm:$0xff]
    %v985 = vld [vmem:[#allocation3 + $0x78] sm:$0xff]
    %986 = vadd.xlane.f32.xlu0 %v970
    %v987 = vpop.xlane.xlu0 %986
    %988 = vadd.xlane.f32.xlu0 %v971
    %v989 = vpop.xlane.xlu0 %988
    %990 = vadd.xlane.f32.xlu0 %v972
    %v991 = vpop.xlane.xlu0 %990
    %992 = vadd.xlane.f32.xlu0 %v973
    %v993 = vpop.xlane.xlu0 %992
    %994 = vadd.xlane.f32.xlu0 %v974
    %v995 = vpop.xlane.xlu0 %994
    %996 = vadd.xlane.f32.xlu0 %v975
    %v997 = vpop.xlane.xlu0 %996
    %998 = vadd.xlane.f32.xlu0 %v976
    %v999 = vpop.xlane.xlu0 %998
    %1000 = vadd.xlane.f32.xlu0 %v977
    %v1001 = vpop.xlane.xlu0 %1000
    %1002 = vadd.xlane.f32.xlu0 %v978
    %v1003 = vpop.xlane.xlu0 %1002
    %1004 = vadd.xlane.f32.xlu0 %v979
    %v1005 = vpop.xlane.xlu0 %1004
    %1006 = vadd.xlane.f32.xlu0 %v980
    %v1007 = vpop.xlane.xlu0 %1006
    %1008 = vadd.xlane.f32.xlu0 %v981
    %v1009 = vpop.xlane.xlu0 %1008
    %1010 = vadd.xlane.f32.xlu0 %v982
    %v1011 = vpop.xlane.xlu0 %1010
    %1012 = vadd.xlane.f32.xlu0 %v983
    %v1013 = vpop.xlane.xlu0 %1012
    %1014 = vadd.xlane.f32.xlu0 %v984
    %v1015 = vpop.xlane.xlu0 %1014
    %1016 = vadd.xlane.f32.xlu0 %v985
    %v1017 = vpop.xlane.xlu0 %1016
    %v1018 = vld [vmem:[#allocation4] sm:$0xff]
    %v1019 = vld [vmem:[#allocation4 + $0x8] sm:$0xff]
    %v1020 = vld [vmem:[#allocation4 + $0x10] sm:$0xff]
    %v1021 = vld [vmem:[#allocation4 + $0x18] sm:$0xff]
    %v1022 = vld [vmem:[#allocation4 + $0x20] sm:$0xff]
    %v1023 = vld [vmem:[#allocation4 + $0x28] sm:$0xff]
    %v1024 = vld [vmem:[#allocation4 + $0x30] sm:$0xff]
    %v1025 = vld [vmem:[#allocation4 + $0x38] sm:$0xff]
    %v1026 = vld [vmem:[#allocation4 + $0x40] sm:$0xff]
    %v1027 = vld [vmem:[#allocation4 + $0x48] sm:$0xff]
    %v1028 = vld [vmem:[#allocation4 + $0x50] sm:$0xff]
    %v1029 = vld [vmem:[#allocation4 + $0x58] sm:$0xff]
    %v1030 = vld [vmem:[#allocation4 + $0x60] sm:$0xff]
    %v1031 = vld [vmem:[#allocation4 + $0x68] sm:$0xff]
    %v1032 = vld [vmem:[#allocation4 + $0x70] sm:$0xff]
    %v1033 = vld [vmem:[#allocation4 + $0x78] sm:$0xff]
    %1034 = vadd.xlane.f32.xlu0 %v1018
    %v1035 = vpop.xlane.xlu0 %1034
    %1036 = vadd.xlane.f32.xlu0 %v1019
    %v1037 = vpop.xlane.xlu0 %1036
    %1038 = vadd.xlane.f32.xlu0 %v1020
    %v1039 = vpop.xlane.xlu0 %1038
    %1040 = vadd.xlane.f32.xlu0 %v1021
    %v1041 = vpop.xlane.xlu0 %1040
    %1042 = vadd.xlane.f32.xlu0 %v1022
    %v1043 = vpop.xlane.xlu0 %1042
    %1044 = vadd.xlane.f32.xlu0 %v1023
    %v1045 = vpop.xlane.xlu0 %1044
    %1046 = vadd.xlane.f32.xlu0 %v1024
    %v1047 = vpop.xlane.xlu0 %1046
    %1048 = vadd.xlane.f32.xlu0 %v1025
    %v1049 = vpop.xlane.xlu0 %1048
    %1050 = vadd.xlane.f32.xlu0 %v1026
    %v1051 = vpop.xlane.xlu0 %1050
    %1052 = vadd.xlane.f32.xlu0 %v1027
    %v1053 = vpop.xlane.xlu0 %1052
    %1054 = vadd.xlane.f32.xlu0 %v1028
    %v1055 = vpop.xlane.xlu0 %1054
    %1056 = vadd.xlane.f32.xlu0 %v1029
    %v1057 = vpop.xlane.xlu0 %1056
    %1058 = vadd.xlane.f32.xlu0 %v1030
    %v1059 = vpop.xlane.xlu0 %1058
    %1060 = vadd.xlane.f32.xlu0 %v1031
    %v1061 = vpop.xlane.xlu0 %1060
    %1062 = vadd.xlane.f32.xlu0 %v1032
    %v1063 = vpop.xlane.xlu0 %1062
    %1064 = vadd.xlane.f32.xlu0 %v1033
    %v1065 = vpop.xlane.xlu0 %1064
    %v1066 = vlog2.pop %v954
    %v1067 = vmul.f32 %v1066, 0.6931472
    %v1068 = vlog2.pop %v955
    %v1069 = vmul.f32 %v1068, 0.6931472
    %v1070 = vlog2.pop %v956
    %v1071 = vmul.f32 %v1070, 0.6931472
    %v1072 = vlog2.pop %v957
    %v1073 = vmul.f32 %v1072, 0.6931472
    %v1074 = vlog2.pop %v958
    %v1075 = vmul.f32 %v1074, 0.6931472
    %v1076 = vlog2.pop %v959
    %v1077 = vmul.f32 %v1076, 0.6931472
    %v1078 = vlog2.pop %v960
    %v1079 = vmul.f32 %v1078, 0.6931472
    %v1080 = vlog2.pop %v961
    %v1081 = vmul.f32 %v1080, 0.6931472
    %v1082 = vlog2.pop %v962
    %v1083 = vmul.f32 %v1082, 0.6931472
    %v1084 = vlog2.pop %v963
    %v1085 = vmul.f32 %v1084, 0.6931472
    %v1086 = vlog2.pop %v964
    %v1087 = vmul.f32 %v1086, 0.6931472
    %v1088 = vlog2.pop %v965
    %v1089 = vmul.f32 %v1088, 0.6931472
    %v1090 = vlog2.pop %v966
    %v1091 = vmul.f32 %v1090, 0.6931472
    %v1092 = vlog2.pop %v967
    %v1093 = vmul.f32 %v1092, 0.6931472
    %v1094 = vlog2.pop %v968
    %v1095 = vmul.f32 %v1094, 0.6931472
    %v1096 = vlog2.pop %v969
    %v1097 = vmul.f32 %v1096, 0.6931472
    %v1098 = vadd.f32 %v1067, 2.0
    %v1099 = vadd.f32 %v1069, 2.0
    %v1100 = vadd.f32 %v1071, 2.0
    %v1101 = vadd.f32 %v1073, 2.0
    %v1102 = vadd.f32 %v1075, 2.0
    %v1103 = vadd.f32 %v1077, 2.0
    %v1104 = vadd.f32 %v1079, 2.0
    %v1105 = vadd.f32 %v1081, 2.0
    %v1106 = vadd.f32 %v1083, 2.0
    %v1107 = vadd.f32 %v1085, 2.0
    %v1108 = vadd.f32 %v1087, 2.0
    %v1109 = vadd.f32 %v1089, 2.0
    %v1110 = vadd.f32 %v1091, 2.0
    %v1111 = vadd.f32 %v1093, 2.0
    %v1112 = vadd.f32 %v1095, 2.0
    %v1113 = vadd.f32 %v1097, 2.0
    %v1114 = vmul.f32 %v1035, %v1098
    %v1115 = vmul.f32 %v1037, %v1099
    %v1116 = vmul.f32 %v1039, %v1100
    %v1117 = vmul.f32 %v1041, %v1101
    %v1118 = vmul.f32 %v1043, %v1102
    %v1119 = vmul.f32 %v1045, %v1103
    %v1120 = vmul.f32 %v1047, %v1104
    %v1121 = vmul.f32 %v1049, %v1105
    %v1122 = vmul.f32 %v1051, %v1106
    %v1123 = vmul.f32 %v1053, %v1107
    %v1124 = vmul.f32 %v1055, %v1108
    %v1125 = vmul.f32 %v1057, %v1109
    %v1126 = vmul.f32 %v1059, %v1110
    %v1127 = vmul.f32 %v1061, %v1111
    %v1128 = vmul.f32 %v1063, %v1112
    %v1129 = vmul.f32 %v1065, %v1113
    %v1130 = vsub.f32 %v987, %v1114
    %v1131 = vsub.f32 %v989, %v1115
    %v1132 = vsub.f32 %v991, %v1116
    %v1133 = vsub.f32 %v993, %v1117
    %v1134 = vsub.f32 %v995, %v1118
    %v1135 = vsub.f32 %v997, %v1119
    %v1136 = vsub.f32 %v999, %v1120
    %v1137 = vsub.f32 %v1001, %v1121
    %v1138 = vsub.f32 %v1003, %v1122
    %v1139 = vsub.f32 %v1005, %v1123
    %v1140 = vsub.f32 %v1007, %v1124
    %v1141 = vsub.f32 %v1009, %v1125
    %v1142 = vsub.f32 %v1011, %v1126
    %v1143 = vsub.f32 %v1013, %v1127
    %v1144 = vsub.f32 %v1015, %v1128
    %v1145 = vsub.f32 %v1017, %v1129
    %v1146 = vrcp.pop %v1035
    %v1147 = vmul.f32 %v1130, %v1146
    %v1148 = vrcp.pop %v1037
    %v1149 = vmul.f32 %v1131, %v1148
    %v1150 = vrcp.pop %v1039
    %v1151 = vmul.f32 %v1132, %v1150
    %v1152 = vrcp.pop %v1041
    %v1153 = vmul.f32 %v1133, %v1152
    %v1154 = vrcp.pop %v1043
    %v1155 = vmul.f32 %v1134, %v1154
    %v1156 = vrcp.pop %v1045
    %v1157 = vmul.f32 %v1135, %v1156
    %v1158 = vrcp.pop %v1047
    %v1159 = vmul.f32 %v1136, %v1158
    %v1160 = vrcp.pop %v1049
    %v1161 = vmul.f32 %v1137, %v1160
    %v1162 = vrcp.pop %v1051
    %v1163 = vmul.f32 %v1138, %v1162
    %v1164 = vrcp.pop %v1053
    %v1165 = vmul.f32 %v1139, %v1164
    %v1166 = vrcp.pop %v1055
    %v1167 = vmul.f32 %v1140, %v1166
    %v1168 = vrcp.pop %v1057
    %v1169 = vmul.f32 %v1141, %v1168
    %v1170 = vrcp.pop %v1059
    %v1171 = vmul.f32 %v1142, %v1170
    %v1172 = vrcp.pop %v1061
    %v1173 = vmul.f32 %v1143, %v1172
    %v1174 = vrcp.pop %v1063
    %v1175 = vmul.f32 %v1144, %v1174
    %v1176 = vrcp.pop %v1065
    %v1177 = vmul.f32 %v1145, %v1176
    %v1178 = vlaneseq
    %v1179 = vshrl.u32 %v1178, 7
    %v1180 = vadd.s32 %v1179, 8
    %v1181 = vadd.s32 %v1179, 16
    %v1182 = vadd.s32 %v1179, 24
    %v1183 = vadd.s32 %v1179, 32
    %v1184 = vadd.s32 %v1179, 40
    %v1185 = vadd.s32 %v1179, 48
    %v1186 = vadd.s32 %v1179, 56
    %v1187 = vadd.s32 %v1179, 64
    %v1188 = vadd.s32 %v1179, 72
    %v1189 = vadd.s32 %v1179, 80
    %v1190 = vadd.s32 %v1179, 88
    %v1191 = vadd.s32 %v1179, 96
    %v1192 = vadd.s32 %v1179, 104
    %v1193 = vadd.s32 %v1179, 112
    %v1194 = vadd.s32 %v1179, 120
    %v1195 = vstv %s453
    %v1196 = vadd.s32 %v1179, %v1195
    %v1197 = vadd.s32 %v1180, %v1195
    %v1198 = vadd.s32 %v1181, %v1195
    %v1199 = vadd.s32 %v1182, %v1195
    %v1200 = vadd.s32 %v1183, %v1195
    %v1201 = vadd.s32 %v1184, %v1195
    %v1202 = vadd.s32 %v1185, %v1195
    %v1203 = vadd.s32 %v1186, %v1195
    %v1204 = vadd.s32 %v1187, %v1195
    %v1205 = vadd.s32 %v1188, %v1195
    %v1206 = vadd.s32 %v1189, %v1195
    %v1207 = vadd.s32 %v1190, %v1195
    %v1208 = vadd.s32 %v1191, %v1195
    %v1209 = vadd.s32 %v1192, %v1195
    %v1210 = vadd.s32 %v1193, %v1195
    %v1211 = vadd.s32 %v1194, %v1195
    %vm1212 = vcmp.lt.s32.totalorder %v1196, 16
    %vm1213 = vcmp.lt.s32.totalorder %v1197, 16
    %vm1214 = vcmp.lt.s32.totalorder %v1198, 16
    %vm1215 = vcmp.lt.s32.totalorder %v1199, 16
    %vm1216 = vcmp.lt.s32.totalorder %v1200, 16
    %vm1217 = vcmp.lt.s32.totalorder %v1201, 16
    %vm1218 = vcmp.lt.s32.totalorder %v1202, 16
    %vm1219 = vcmp.lt.s32.totalorder %v1203, 16
    %vm1220 = vcmp.lt.s32.totalorder %v1204, 16
    %vm1221 = vcmp.lt.s32.totalorder %v1205, 16
    %vm1222 = vcmp.lt.s32.totalorder %v1206, 16
    %vm1223 = vcmp.lt.s32.totalorder %v1207, 16
    %vm1224 = vcmp.lt.s32.totalorder %v1208, 16
    %vm1225 = vcmp.lt.s32.totalorder %v1209, 16
    %vm1226 = vcmp.lt.s32.totalorder %v1210, 16
    %vm1227 = vcmp.lt.s32.totalorder %v1211, 16
    %v1228 = vsub.f32 0.0, %v1147
    %v1229 = vsub.f32 0.0, %v1149
    %v1230 = vsub.f32 0.0, %v1151
    %v1231 = vsub.f32 0.0, %v1153
    %v1232 = vsub.f32 0.0, %v1155
    %v1233 = vsub.f32 0.0, %v1157
    %v1234 = vsub.f32 0.0, %v1159
    %v1235 = vsub.f32 0.0, %v1161
    %v1236 = vsub.f32 0.0, %v1163
    %v1237 = vsub.f32 0.0, %v1165
    %v1238 = vsub.f32 0.0, %v1167
    %v1239 = vsub.f32 0.0, %v1169
    %v1240 = vsub.f32 0.0, %v1171
    %v1241 = vsub.f32 0.0, %v1173
    %v1242 = vsub.f32 0.0, %v1175
    %v1243 = vsub.f32 0.0, %v1177
    %v1244 = vsel %vm1212, %v1228, 0.0
    %v1245 = vsel %vm1213, %v1229, 0.0
    %v1246 = vsel %vm1214, %v1230, 0.0
    %v1247 = vsel %vm1215, %v1231, 0.0
    %v1248 = vsel %vm1216, %v1232, 0.0
    %v1249 = vsel %vm1217, %v1233, 0.0
    %v1250 = vsel %vm1218, %v1234, 0.0
    %v1251 = vsel %vm1219, %v1235, 0.0
    %v1252 = vsel %vm1220, %v1236, 0.0
    %v1253 = vsel %vm1221, %v1237, 0.0
    %v1254 = vsel %vm1222, %v1238, 0.0
    %v1255 = vsel %vm1223, %v1239, 0.0
    %v1256 = vsel %vm1224, %v1240, 0.0
    %v1257 = vsel %vm1225, %v1241, 0.0
    %v1258 = vsel %vm1226, %v1242, 0.0
    %v1259 = vsel %vm1227, %v1243, 0.0
    %vm1260 = vcmask 7168
    %1261 = vst.msk [vmem:[%s4] sm:$0xff] %vm1260, %v1244
    %1262 = vst.msk [vmem:[%s4 + $0x8] sm:$0xff] %vm1260, %v1245
    %1263 = vst.msk [vmem:[%s4 + $0x10] sm:$0xff] %vm1260, %v1246
    %1264 = vst.msk [vmem:[%s4 + $0x18] sm:$0xff] %vm1260, %v1247
    %1265 = vst.msk [vmem:[%s4 + $0x20] sm:$0xff] %vm1260, %v1248
    %1266 = vst.msk [vmem:[%s4 + $0x28] sm:$0xff] %vm1260, %v1249
    %1267 = vst.msk [vmem:[%s4 + $0x30] sm:$0xff] %vm1260, %v1250
    %1268 = vst.msk [vmem:[%s4 + $0x38] sm:$0xff] %vm1260, %v1251
    %1269 = vst.msk [vmem:[%s4 + $0x40] sm:$0xff] %vm1260, %v1252
    %1270 = vst.msk [vmem:[%s4 + $0x48] sm:$0xff] %vm1260, %v1253
    %1271 = vst.msk [vmem:[%s4 + $0x50] sm:$0xff] %vm1260, %v1254
    %1272 = vst.msk [vmem:[%s4 + $0x58] sm:$0xff] %vm1260, %v1255
    %1273 = vst.msk [vmem:[%s4 + $0x60] sm:$0xff] %vm1260, %v1256
    %1274 = vst.msk [vmem:[%s4 + $0x68] sm:$0xff] %vm1260, %v1257
    %1275 = vst.msk [vmem:[%s4 + $0x70] sm:$0xff] %vm1260, %v1258
    %1276 = vst.msk [vmem:[%s4 + $0x78] sm:$0xff] %vm1260, %v1259
  $region33: #{tpu_custom_call.1} parent=0 // pred_fallthru
    _
  // Predicated region
  $region34: #{tpu_custom_call.1} parent=0 // pred_check
    _
  $region35: #{tpu_custom_call.1} parent=0 // pred_check_branch
    %1278 = sbr.rel (0) target = $region37
  $region36: #{tpu_custom_call.1} parent=0 // pred_region
    _
  $region37: #{tpu_custom_call.1} parent=0 // pred_fallthru
    _
  // Predicated region
  $region38: #{tpu_custom_call.1} parent=0 // pred_check
    _
  $region39: #{tpu_custom_call.1} parent=0 // pred_check_branch
    %1280 = sbr.rel (0) target = $region41
  $region40: #{tpu_custom_call.1} parent=0 // pred_region
    _
  $region41: #{tpu_custom_call.1} parent=0 // pred_fallthru
    _

</llo_original>
